<compile_context>
chip_gen: v7x
topology: tpu7x:2x2x1
jax: 0.10.0
libtpu: 0.0.40
codegen_flags: <defaults>
</compile_context>

<pallas_src>
import jax
import jax.numpy as jnp
import numpy as np
from jax import lax
from jax.experimental import pallas as pl
from jax.experimental.pallas import tpu as pltpu

KSIZE = 7
PAD = (KSIZE - 1) // 2     # 3
_CHUNK = 8                 # sublane-full channel chunk
_UNROLL_B = 8              # Python-unroll the per-image loops up to this nb


def _make_kernel(C, H, W, nb, x_dtype):
    HW = H * W
    LP = (H + 2 * PAD) * W + 2 * PAD   # flat row-padded row length (+PAD lane guards)
    OFF = PAD + PAD * W                # flat offset of the real data inside a row
    num_full = C // _CHUNK
    rem = C - num_full * _CHUNK
    chunk_unroll = 4

    def col_in_row(idx):
        # (k mod W) for a flat row-major index k.
        if W & (W - 1) == 0:
            return jnp.bitwise_and(idx, W - 1)
        return lax.rem(idx, jnp.int32(W))

    def pool_one(xb):
        """Running max / mean over C for one image; xb is a (C, HW) ref view."""
        cmax = None
        csum = None
        if num_full > 0:
            if num_full <= 8:                        # static chunk loop
                for ci in range(num_full):
                    ch = xb[pl.ds(ci * _CHUNK, _CHUNK), :].astype(jnp.float32)
                    cmax = ch if cmax is None else jnp.maximum(cmax, ch)
                    csum = ch if csum is None else csum + ch
            else:                                    # fori over chunks, partial unroll
                c0 = xb[pl.ds(0, _CHUNK), :].astype(jnp.float32)

                def body(ci, carry):
                    m, s = carry
                    o = pl.multiple_of(ci * _CHUNK, _CHUNK)
                    ch = xb[pl.ds(o, _CHUNK), :].astype(jnp.float32)
                    return jnp.maximum(m, ch), s + ch

                cmax, csum = lax.fori_loop(1, num_full, body, (c0, c0),
                                           unroll=chunk_unroll)
            cmax = jnp.max(cmax, axis=0, keepdims=True)      # (1, HW)
            csum = jnp.sum(csum, axis=0, keepdims=True)
        if rem > 0:
            cr = xb[pl.ds(num_full * _CHUNK, rem), :].astype(jnp.float32)
            rmax = jnp.max(cr, axis=0, keepdims=True)
            rsum = jnp.sum(cr, axis=0, keepdims=True)
            cmax = rmax if cmax is None else jnp.maximum(cmax, rmax)
            csum = rsum if csum is None else csum + rsum
        return cmax, csum * (1.0 / C)

    def apply_one(xb, ob, gate_row):
        """ob = xb * gate for one image, in sublane-full channel chunks."""
        gate_x = gate_row.astype(x_dtype)    # bf16 multiply when x is bf16

        def do_chunk(c0, sz):
            ob[pl.ds(c0, sz), :] = (xb[pl.ds(c0, sz), :] * gate_x).astype(x_dtype)

        if num_full > 0:
            if num_full <= 8:
                for ci in range(num_full):
                    do_chunk(ci * _CHUNK, _CHUNK)
            else:
                def body(ci, carry):
                    do_chunk(pl.multiple_of(ci * _CHUNK, _CHUNK), _CHUNK)
                    return carry

                lax.fori_loop(0, num_full, body, 0, unroll=chunk_unroll)
        if rem > 0:
            do_chunk(num_full * _CHUNK, rem)

    def kernel(x_ref, w_ref, bias_ref, o_ref, p_ref, g_ref):
        # x_ref : (nb, C, HW) VMEM   lane-dense input block
        # w_ref : (2*49,)     SMEM   conv weights with BN scale folded in
        # bias_ref : (1,)     SMEM   folded BN bias
        # o_ref : (nb, C, HW) VMEM
        # p_ref : (2*nb, LP)  VMEM   flat row-padded pooled maps
        #                            rows [0, nb) = max maps, [nb, 2nb) = mean maps
        # g_ref : (nb, HW)    VMEM   per-image sigmoid gate
        f32 = jnp.float32

        # Zero only the halo guards each step (interior is fully overwritten
        # below).  A pl.when(program_id == 0) one-shot init would be unsafe
        # because the batch grid axis is "parallel" (per-core scratch).
        p_ref[pl.ds(0, 2 * nb), pl.ds(0, OFF)] = jnp.zeros((2 * nb, OFF), f32)
        p_ref[pl.ds(0, 2 * nb), pl.ds(OFF + HW, LP - OFF - HW)] = jnp.zeros(
            (2 * nb, LP - OFF - HW), f32)

        # --- Phase 1: ChannelPool (max & mean over C), 8-channel chunks. -----
        def pool_into(b):
            cmax, cmean = pool_one(x_ref.at[b])
            p_ref[pl.ds(b, 1), pl.ds(OFF, HW)] = cmax
            p_ref[pl.ds(nb + b, 1), pl.ds(OFF, HW)] = cmean

        if nb <= _UNROLL_B:
            for b in range(nb):
                pool_into(b)
        else:
            def pool_body(b, carry):
                pool_into(b)
                return carry

            lax.fori_loop(0, nb, pool_body, 0)

        # --- Phase 2: 7x7 "same" conv (2 -> 1 ch), batched over 2*nb maps. ---
        # out[k] = sum_{u,v} wcol_{u,v} * colmask_v[k] * P[:, k + u*W + v]
        col = col_in_row(lax.broadcasted_iota(jnp.int32, (1, HW), 1))
        row_is_max = lax.broadcasted_iota(jnp.int32, (2 * nb, 1), 0) < nb

        acc_a = jnp.zeros((2 * nb, HW), f32)
        acc_b = jnp.zeros((2 * nb, HW), f32)
        for v in range(KSIZE):
            colmask = (col >= PAD - v) & (col < W + PAD - v)
            part_a = jnp.zeros((2 * nb, HW), f32)
            part_b = jnp.zeros((2 * nb, HW), f32)
            for u in range(KSIZE):
                off = u * W + v
                w0 = w_ref[u * KSIZE + v]                    # max-map weight
                w1 = w_ref[KSIZE * KSIZE + u * KSIZE + v]    # mean-map weight
                wcol = jnp.where(row_is_max, w0, w1)         # (2*nb, 1)
                term = wcol * p_ref[pl.ds(0, 2 * nb), pl.ds(off, HW)]
                if u % 2 == 0:
                    part_a = part_a + term
                else:
                    part_b = part_b + term
            masked = jnp.where(colmask, part_a + part_b, 0.0)
            if v % 2 == 0:
                acc_a = acc_a + masked
            else:
                acc_b = acc_b + masked
        conv = acc_a + acc_b                                  # (2*nb, HW)
        logits = conv[0:nb] + conv[nb:2 * nb] + bias_ref[0]   # (nb, HW)
        g_ref[...] = jax.nn.sigmoid(logits)

        # --- Phase 3: apply the gate with sublane-full unmasked stores. ------
        def apply_b(b):
            apply_one(x_ref.at[b], o_ref.at[b], g_ref[pl.ds(b, 1), :])

        if nb <= _UNROLL_B:
            for b in range(nb):
                apply_b(b)
        else:
            def apply_body(b, carry):
                apply_b(b)
                return carry

            lax.fori_loop(0, nb, apply_body, 0)

    return kernel


def _vmem_limit_bytes():
    """Per-generation scoped-VMEM budget (<= ~54 MiB on v7x, <= 96 MiB else)."""
    cap = 128 << 20
    try:
        cap = int(pltpu.get_tpu_info().vmem_capacity_bytes)
    except Exception:
        pass
    return int(min(cap * 27 // 32, 96 << 20))


def _choose_batch_block(N, C, H, W, itemsize, vmem_limit):
    HW = H * W
    LP = (H + 2 * PAD) * W + 2 * PAD
    per_image_io = C * HW * itemsize                 # one copy of x (or of out)
    per_image_scr = 2 * LP * 4 + HW * 4              # p_ref + g_ref rows

    # ~1 MiB input blocks per grid step (>=512 KiB reaches ~85% of HBM roofline).
    nb = int(min(N, 64, max(1, (1 << 20) // max(1, per_image_io))))
    while N % nb:
        nb -= 1

    # Keep double-buffered in+out blocks plus scratch well inside the budget.
    def fits(n):
        return 2 * (4 * n * per_image_io + n * per_image_scr) <= vmem_limit

    while nb > 1 and not fits(nb):
        nb -= 1
        while N % nb:
            nb -= 1

    # Prefer >= 2 grid steps (feeds both v7x TensorCores) when halving keeps
    # blocks >= ~512 KiB.
    if N // nb < 2 and nb > 1:
        half = nb // 2
        while half > 1 and N % half:
            half -= 1
        if half >= 1 and N % half == 0 and half * per_image_io >= (512 << 10):
            nb = half
    return nb


def spatial_gate_c(x, conv_w, gamma, beta, run_mean, run_var, eps=1e-5,
                   batch_block=None, inplace=False):
    """x: (N, C, H, W).  conv_w: (1, 2, 7, 7).  BN params: shape (1,)."""
    N, C, H, W = x.shape
    HW = H * W
    LP = (H + 2 * PAD) * W + 2 * PAD
    itemsize = jnp.dtype(x.dtype).itemsize

    vmem_limit = _vmem_limit_bytes()
    if batch_block is None:
        batch_block = _choose_batch_block(N, C, H, W, itemsize, vmem_limit)
    nb = int(batch_block)
    assert N % nb == 0
    # TODO(synk): if even nb == 1 overflows the VMEM budget (very large C*H*W),
    # a channel-tiled two-pass variant (gate pass + tiled multiply) is needed.

    # Fold eval-mode BatchNorm into the conv weights + a single bias.
    bn_scale = (gamma / jnp.sqrt(run_var + eps)).astype(jnp.float32)   # (1,)
    bn_bias = (beta - run_mean * bn_scale).astype(jnp.float32)         # (1,)
    w_eff = (conv_w.astype(jnp.float32) * bn_scale[0]).reshape(-1)     # (98,)

    x_flat = x.reshape(N, C, HW)   # lane-dense trailing dim

    out_flat = pl.pallas_call(
        _make_kernel(C, H, W, nb, x.dtype),
        out_shape=jax.ShapeDtypeStruct((N, C, HW), x.dtype),
        grid=(N // nb,),
        in_specs=[
            pl.BlockSpec((nb, C, HW), lambda b: (b, 0, 0)),
            pl.BlockSpec(memory_space=pltpu.MemorySpace.SMEM),
            pl.BlockSpec(memory_space=pltpu.MemorySpace.SMEM),
        ],
        out_specs=pl.BlockSpec((nb, C, HW), lambda b: (b, 0, 0)),
        scratch_shapes=[
            pltpu.VMEM((2 * nb, LP), jnp.float32),   # pooled maps (row-padded)
            pltpu.VMEM((nb, HW), jnp.float32),       # per-image gate
        ],
        input_output_aliases=({0: 0} if inplace else {}),
        compiler_params=pltpu.CompilerParams(
            dimension_semantics=("parallel",),
            vmem_limit_bytes=vmem_limit),
    )(x_flat, w_eff, bn_bias)
    return out_flat.reshape(N, C, H, W)


def ref_forward(x, conv_w, gamma, beta, run_mean, run_var, eps=1e-5):
    """Pure-JAX reference mirroring the PyTorch forward (eval-mode BN)."""
    cmax = jnp.max(x, axis=1, keepdims=True)
    cmean = jnp.mean(x, axis=1, keepdims=True)
    pooled = jnp.concatenate([cmax, cmean], axis=1)                # (N,2,H,W)
    conv = jax.lax.conv_general_dilated(
        pooled, conv_w, window_strides=(1, 1),
        padding=[(PAD, PAD), (PAD, PAD)],
        dimension_numbers=("NCHW", "OIHW", "NCHW"),
        precision=jax.lax.Precision.HIGHEST)                       # (N,1,H,W)
    bn = (conv - run_mean) / jnp.sqrt(run_var + eps) * gamma + beta
    return x * jax.nn.sigmoid(bn)


if __name__ == "__main__":
    key = jax.random.PRNGKey(0)
    k_x, k_w, k_g, k_b, k_m, k_v = jax.random.split(key, 6)

    N, C, H, W = 2, 4, 16, 16
    x = jax.random.normal(k_x, (N, C, H, W), dtype=jnp.float32)

    # Deterministic synthetic parameters (shapes from the module __init__).
    conv_w = jax.random.normal(k_w, (1, 2, KSIZE, KSIZE), jnp.float32) * 0.1
    gamma = 1.0 + 0.1 * jax.random.normal(k_g, (1,), jnp.float32)
    beta = 0.1 * jax.random.normal(k_b, (1,), jnp.float32)
    run_mean = 0.1 * jax.random.normal(k_m, (1,), jnp.float32)
    run_var = 1.0 + 0.1 * jax.random.uniform(k_v, (1,), jnp.float32)

    out = spatial_gate_c(x, conv_w, gamma, beta, run_mean, run_var)
    out = jax.block_until_ready(out)

    ref = ref_forward(x, conv_w, gamma, beta, run_mean, run_var)
    np.testing.assert_allclose(np.asarray(out), np.asarray(ref),
                               rtol=1e-5, atol=1e-5)
    print("KERNEL_OK")
</pallas_src>

<mosaic_0001>
module attributes {stable_mosaic.version = 11 : i64} {
  func.func @kernel(%arg0: i32, %arg1: memref<2x4x256xf32, #tpu.memory_space<vmem>>, %arg2: memref<98xf32, #tpu.memory_space<smem>>, %arg3: memref<1xf32, #tpu.memory_space<smem>>, %arg4: memref<2x4x256xf32, #tpu.memory_space<vmem>>, %arg5: memref<4x358xf32, #tpu.memory_space<vmem>>, %arg6: memref<2x256xf32, #tpu.memory_space<vmem>>) attributes {dimension_semantics = [#tpu.dimension_semantics<parallel>], iteration_bounds = array<i64: 1>, scalar_prefetch = 0 : i64, scratch_operands = 2 : i64, tpu.core_type = #tpu.core_type<tc>, window_params = [{transform_indices = @transform_0, window_bounds = array<i64: 2, 4, 256>}, {transform_indices = @transform_1, window_bounds = array<i64: 98>}, {transform_indices = @transform_2, window_bounds = array<i64: 1>}, {transform_indices = @transform_3, window_bounds = array<i64: 2, 4, 256>}]} {
    %cst = arith.constant 0.000000e+00 : f32
    %0 = vector.broadcast %cst : f32 to vector<4x51xf32>
    %c0 = arith.constant 0 : index
    %c0_0 = arith.constant 0 : index
    %1 = vector.load %arg5[%c0, %c0_0] : memref<4x358xf32, #tpu.memory_space<vmem>>, vector<4x51xf32>
    tpu.vector_store %arg5[%c0, %c0_0], %0 {strides = array<i32>} : memref<4x358xf32, #tpu.memory_space<vmem>>, vector<4x51xf32>,
    %cst_1 = arith.constant 0.000000e+00 : f32
    %2 = vector.broadcast %cst_1 : f32 to vector<4x51xf32>
    %c0_2 = arith.constant 0 : index
    %c307 = arith.constant 307 : index
    %3 = vector.load %arg5[%c0_2, %c307] : memref<4x358xf32, #tpu.memory_space<vmem>>, vector<4x51xf32>
    tpu.vector_store %arg5[%c0_2, %c307], %2 {strides = array<i32>} : memref<4x358xf32, #tpu.memory_space<vmem>>, vector<4x51xf32>,
    %c0_i32 = arith.constant 0 : i32
    %c0_i32_3 = arith.constant 0 : i32
    %c0_i32_4 = arith.constant 0 : i32
    %4 = tpu.memref_slice %arg1[%c0_i32, %c0_i32_3, %c0_i32_4] : memref<2x4x256xf32, #tpu.memory_space<vmem>> -> memref<1x4x256xf32, #tpu.memory_space<vmem>>
    %5 = tpu.memref_squeeze %4 : memref<1x4x256xf32, #tpu.memory_space<vmem>> -> memref<4x256xf32, #tpu.memory_space<vmem>>
    %c0_5 = arith.constant 0 : index
    %c0_6 = arith.constant 0 : index
    %6 = vector.load %5[%c0_5, %c0_6] : memref<4x256xf32, #tpu.memory_space<vmem>>, vector<4x256xf32>
    %cst_7 = arith.constant dense<0xFF800000> : vector<256xf32>
    %7 = vector.multi_reduction <maximumf>, %6, %cst_7 [0] : vector<4x256xf32> to vector<256xf32>
    %8 = vector.shape_cast %7 : vector<256xf32> to vector<1x256xf32>
    %cst_8 = arith.constant dense<0.000000e+00> : vector<256xf32>
    %9 = vector.multi_reduction <add>, %6, %cst_8 [0] : vector<4x256xf32> to vector<256xf32>
    %10 = vector.shape_cast %9 : vector<256xf32> to vector<1x256xf32>
    %cst_9 = arith.constant 2.500000e-01 : f32
    %11 = vector.broadcast %cst_9 : f32 to vector<1x256xf32>
    %12 = arith.mulf %10, %11 : vector<1x256xf32>
    %c0_10 = arith.constant 0 : index
    %c51 = arith.constant 51 : index
    %13 = vector.load %arg5[%c0_10, %c51] : memref<4x358xf32, #tpu.memory_space<vmem>>, vector<1x256xf32>
    tpu.vector_store %arg5[%c0_10, %c51], %8 {strides = array<i32>} : memref<4x358xf32, #tpu.memory_space<vmem>>, vector<1x256xf32>,
    %c2 = arith.constant 2 : index
    %c51_11 = arith.constant 51 : index
    %14 = vector.load %arg5[%c2, %c51_11] : memref<4x358xf32, #tpu.memory_space<vmem>>, vector<1x256xf32>
    tpu.vector_store %arg5[%c2, %c51_11], %12 {strides = array<i32>} : memref<4x358xf32, #tpu.memory_space<vmem>>, vector<1x256xf32>,
    %c1_i32 = arith.constant 1 : i32
    %c0_i32_12 = arith.constant 0 : i32
    %c0_i32_13 = arith.constant 0 : i32
    %15 = tpu.memref_slice %arg1[%c1_i32, %c0_i32_12, %c0_i32_13] : memref<2x4x256xf32, #tpu.memory_space<vmem>> -> memref<1x4x256xf32, #tpu.memory_space<vmem>>
    %16 = tpu.memref_squeeze %15 : memref<1x4x256xf32, #tpu.memory_space<vmem>> -> memref<4x256xf32, #tpu.memory_space<vmem>>
    %c0_14 = arith.constant 0 : index
    %c0_15 = arith.constant 0 : index
    %17 = vector.load %16[%c0_14, %c0_15] : memref<4x256xf32, #tpu.memory_space<vmem>>, vector<4x256xf32>
    %cst_16 = arith.constant dense<0xFF800000> : vector<256xf32>
    %18 = vector.multi_reduction <maximumf>, %17, %cst_16 [0] : vector<4x256xf32> to vector<256xf32>
    %19 = vector.shape_cast %18 : vector<256xf32> to vector<1x256xf32>
    %cst_17 = arith.constant dense<0.000000e+00> : vector<256xf32>
    %20 = vector.multi_reduction <add>, %17, %cst_17 [0] : vector<4x256xf32> to vector<256xf32>
    %21 = vector.shape_cast %20 : vector<256xf32> to vector<1x256xf32>
    %cst_18 = arith.constant 2.500000e-01 : f32
    %22 = vector.broadcast %cst_18 : f32 to vector<1x256xf32>
    %23 = arith.mulf %21, %22 : vector<1x256xf32>
    %c1 = arith.constant 1 : index
    %c51_19 = arith.constant 51 : index
    %24 = vector.load %arg5[%c1, %c51_19] : memref<4x358xf32, #tpu.memory_space<vmem>>, vector<1x256xf32>
    tpu.vector_store %arg5[%c1, %c51_19], %19 {strides = array<i32>} : memref<4x358xf32, #tpu.memory_space<vmem>>, vector<1x256xf32>,
    %c3 = arith.constant 3 : index
    %c51_20 = arith.constant 51 : index
    %25 = vector.load %arg5[%c3, %c51_20] : memref<4x358xf32, #tpu.memory_space<vmem>>, vector<1x256xf32>
    tpu.vector_store %arg5[%c3, %c51_20], %23 {strides = array<i32>} : memref<4x358xf32, #tpu.memory_space<vmem>>, vector<1x256xf32>,
    %26 = tpu.iota {dimensions = array<i32: 1>} : vector<1x256xi32>
    %c15_i32 = arith.constant 15 : i32
    %27 = vector.broadcast %c15_i32 : i32 to vector<1x256xi32>
    %28 = arith.andi %26, %27 : vector<1x256xi32>
    %29 = tpu.iota {dimensions = array<i32: 0>} : vector<4x1xi32>
    %c2_i32 = arith.constant 2 : i32
    %30 = vector.broadcast %c2_i32 : i32 to vector<4x1xi32>
    %31 = arith.cmpi slt, %29, %30 : vector<4x1xi32>
    %cst_21 = arith.constant 0.000000e+00 : f32
    %32 = vector.broadcast %cst_21 : f32 to vector<4x256xf32>
    %cst_22 = arith.constant 0.000000e+00 : f32
    %33 = vector.broadcast %cst_22 : f32 to vector<4x256xf32>
    %c3_i32 = arith.constant 3 : i32
    %34 = vector.broadcast %c3_i32 : i32 to vector<1x256xi32>
    %35 = arith.cmpi sge, %28, %34 : vector<1x256xi32>
    %c19_i32 = arith.constant 19 : i32
    %36 = vector.broadcast %c19_i32 : i32 to vector<1x256xi32>
    %37 = arith.cmpi slt, %28, %36 : vector<1x256xi32>
    %38 = arith.andi %35, %37 : vector<1x256xi1>
    %cst_23 = arith.constant 0.000000e+00 : f32
    %39 = vector.broadcast %cst_23 : f32 to vector<4x256xf32>
    %cst_24 = arith.constant 0.000000e+00 : f32
    %40 = vector.broadcast %cst_24 : f32 to vector<4x256xf32>
    %c0_25 = arith.constant 0 : index
    %41 = memref.load %arg2[%c0_25] : memref<98xf32, #tpu.memory_space<smem>>
    %c49 = arith.constant 49 : index
    %42 = memref.load %arg2[%c49] : memref<98xf32, #tpu.memory_space<smem>>
    %43 = vector.broadcast %41 : f32 to vector<4x1xf32>
    %44 = vector.broadcast %42 : f32 to vector<4x1xf32>
    %45 = arith.select %31, %43, %44 : vector<4x1xi1>, vector<4x1xf32>
    %c0_26 = arith.constant 0 : index
    %c0_27 = arith.constant 0 : index
    %46 = vector.load %arg5[%c0_26, %c0_27] : memref<4x358xf32, #tpu.memory_space<vmem>>, vector<4x256xf32>
    %47 = vector.broadcast %45 : vector<4x1xf32> to vector<4x256xf32>
    %48 = arith.mulf %47, %46 : vector<4x256xf32>
    %49 = arith.addf %39, %48 : vector<4x256xf32>
    %c7 = arith.constant 7 : index
    %50 = memref.load %arg2[%c7] : memref<98xf32, #tpu.memory_space<smem>>
    %c56 = arith.constant 56 : index
    %51 = memref.load %arg2[%c56] : memref<98xf32, #tpu.memory_space<smem>>
    %52 = vector.broadcast %50 : f32 to vector<4x1xf32>
    %53 = vector.broadcast %51 : f32 to vector<4x1xf32>
    %54 = arith.select %31, %52, %53 : vector<4x1xi1>, vector<4x1xf32>
    %c0_28 = arith.constant 0 : index
    %c16 = arith.constant 16 : index
    %55 = vector.load %arg5[%c0_28, %c16] : memref<4x358xf32, #tpu.memory_space<vmem>>, vector<4x256xf32>
    %56 = vector.broadcast %54 : vector<4x1xf32> to vector<4x256xf32>
    %57 = arith.mulf %56, %55 : vector<4x256xf32>
    %58 = arith.addf %40, %57 : vector<4x256xf32>
    %c14 = arith.constant 14 : index
    %59 = memref.load %arg2[%c14] : memref<98xf32, #tpu.memory_space<smem>>
    %c63 = arith.constant 63 : index
    %60 = memref.load %arg2[%c63] : memref<98xf32, #tpu.memory_space<smem>>
    %61 = vector.broadcast %59 : f32 to vector<4x1xf32>
    %62 = vector.broadcast %60 : f32 to vector<4x1xf32>
    %63 = arith.select %31, %61, %62 : vector<4x1xi1>, vector<4x1xf32>
    %c0_29 = arith.constant 0 : index
    %c32 = arith.constant 32 : index
    %64 = vector.load %arg5[%c0_29, %c32] : memref<4x358xf32, #tpu.memory_space<vmem>>, vector<4x256xf32>
    %65 = vector.broadcast %63 : vector<4x1xf32> to vector<4x256xf32>
    %66 = arith.mulf %65, %64 : vector<4x256xf32>
    %67 = arith.addf %49, %66 : vector<4x256xf32>
    %c21 = arith.constant 21 : index
    %68 = memref.load %arg2[%c21] : memref<98xf32, #tpu.memory_space<smem>>
    %c70 = arith.constant 70 : index
    %69 = memref.load %arg2[%c70] : memref<98xf32, #tpu.memory_space<smem>>
    %70 = vector.broadcast %68 : f32 to vector<4x1xf32>
    %71 = vector.broadcast %69 : f32 to vector<4x1xf32>
    %72 = arith.select %31, %70, %71 : vector<4x1xi1>, vector<4x1xf32>
    %c0_30 = arith.constant 0 : index
    %c48 = arith.constant 48 : index
    %73 = vector.load %arg5[%c0_30, %c48] : memref<4x358xf32, #tpu.memory_space<vmem>>, vector<4x256xf32>
    %74 = vector.broadcast %72 : vector<4x1xf32> to vector<4x256xf32>
    %75 = arith.mulf %74, %73 : vector<4x256xf32>
    %76 = arith.addf %58, %75 : vector<4x256xf32>
    %c28 = arith.constant 28 : index
    %77 = memref.load %arg2[%c28] : memref<98xf32, #tpu.memory_space<smem>>
    %c77 = arith.constant 77 : index
    %78 = memref.load %arg2[%c77] : memref<98xf32, #tpu.memory_space<smem>>
    %79 = vector.broadcast %77 : f32 to vector<4x1xf32>
    %80 = vector.broadcast %78 : f32 to vector<4x1xf32>
    %81 = arith.select %31, %79, %80 : vector<4x1xi1>, vector<4x1xf32>
    %c0_31 = arith.constant 0 : index
    %c64 = arith.constant 64 : index
    %82 = vector.load %arg5[%c0_31, %c64] : memref<4x358xf32, #tpu.memory_space<vmem>>, vector<4x256xf32>
    %83 = vector.broadcast %81 : vector<4x1xf32> to vector<4x256xf32>
    %84 = arith.mulf %83, %82 : vector<4x256xf32>
    %85 = arith.addf %67, %84 : vector<4x256xf32>
    %c35 = arith.constant 35 : index
    %86 = memref.load %arg2[%c35] : memref<98xf32, #tpu.memory_space<smem>>
    %c84 = arith.constant 84 : index
    %87 = memref.load %arg2[%c84] : memref<98xf32, #tpu.memory_space<smem>>
    %88 = vector.broadcast %86 : f32 to vector<4x1xf32>
    %89 = vector.broadcast %87 : f32 to vector<4x1xf32>
    %90 = arith.select %31, %88, %89 : vector<4x1xi1>, vector<4x1xf32>
    %c0_32 = arith.constant 0 : index
    %c80 = arith.constant 80 : index
    %91 = vector.load %arg5[%c0_32, %c80] : memref<4x358xf32, #tpu.memory_space<vmem>>, vector<4x256xf32>
    %92 = vector.broadcast %90 : vector<4x1xf32> to vector<4x256xf32>
    %93 = arith.mulf %92, %91 : vector<4x256xf32>
    %94 = arith.addf %76, %93 : vector<4x256xf32>
    %c42 = arith.constant 42 : index
    %95 = memref.load %arg2[%c42] : memref<98xf32, #tpu.memory_space<smem>>
    %c91 = arith.constant 91 : index
    %96 = memref.load %arg2[%c91] : memref<98xf32, #tpu.memory_space<smem>>
    %97 = vector.broadcast %95 : f32 to vector<4x1xf32>
    %98 = vector.broadcast %96 : f32 to vector<4x1xf32>
    %99 = arith.select %31, %97, %98 : vector<4x1xi1>, vector<4x1xf32>
    %c0_33 = arith.constant 0 : index
    %c96 = arith.constant 96 : index
    %100 = vector.load %arg5[%c0_33, %c96] : memref<4x358xf32, #tpu.memory_space<vmem>>, vector<4x256xf32>
    %101 = vector.broadcast %99 : vector<4x1xf32> to vector<4x256xf32>
    %102 = arith.mulf %101, %100 : vector<4x256xf32>
    %103 = arith.addf %85, %102 : vector<4x256xf32>
    %104 = arith.addf %103, %94 : vector<4x256xf32>
    %cst_34 = arith.constant 0.000000e+00 : f32
    %105 = vector.shape_cast %38 : vector<1x256xi1> to vector<1x256xi1>
    %106 = vector.broadcast %105 : vector<1x256xi1> to vector<4x256xi1>
    %107 = vector.broadcast %cst_34 : f32 to vector<4x256xf32>
    %108 = arith.select %106, %104, %107 : vector<4x256xi1>, vector<4x256xf32>
    %109 = arith.addf %32, %108 : vector<4x256xf32>
    %c2_i32_35 = arith.constant 2 : i32
    %110 = vector.broadcast %c2_i32_35 : i32 to vector<1x256xi32>
    %111 = arith.cmpi sge, %28, %110 : vector<1x256xi32>
    %c18_i32 = arith.constant 18 : i32
    %112 = vector.broadcast %c18_i32 : i32 to vector<1x256xi32>
    %113 = arith.cmpi slt, %28, %112 : vector<1x256xi32>
    %114 = arith.andi %111, %113 : vector<1x256xi1>
    %cst_36 = arith.constant 0.000000e+00 : f32
    %115 = vector.broadcast %cst_36 : f32 to vector<4x256xf32>
    %cst_37 = arith.constant 0.000000e+00 : f32
    %116 = vector.broadcast %cst_37 : f32 to vector<4x256xf32>
    %c1_38 = arith.constant 1 : index
    %117 = memref.load %arg2[%c1_38] : memref<98xf32, #tpu.memory_space<smem>>
    %c50 = arith.constant 50 : index
    %118 = memref.load %arg2[%c50] : memref<98xf32, #tpu.memory_space<smem>>
    %119 = vector.broadcast %117 : f32 to vector<4x1xf32>
    %120 = vector.broadcast %118 : f32 to vector<4x1xf32>
    %121 = arith.select %31, %119, %120 : vector<4x1xi1>, vector<4x1xf32>
    %c0_39 = arith.constant 0 : index
    %c1_40 = arith.constant 1 : index
    %122 = vector.load %arg5[%c0_39, %c1_40] : memref<4x358xf32, #tpu.memory_space<vmem>>, vector<4x256xf32>
    %123 = vector.broadcast %121 : vector<4x1xf32> to vector<4x256xf32>
    %124 = arith.mulf %123, %122 : vector<4x256xf32>
    %125 = arith.addf %115, %124 : vector<4x256xf32>
    %c8 = arith.constant 8 : index
    %126 = memref.load %arg2[%c8] : memref<98xf32, #tpu.memory_space<smem>>
    %c57 = arith.constant 57 : index
    %127 = memref.load %arg2[%c57] : memref<98xf32, #tpu.memory_space<smem>>
    %128 = vector.broadcast %126 : f32 to vector<4x1xf32>
    %129 = vector.broadcast %127 : f32 to vector<4x1xf32>
    %130 = arith.select %31, %128, %129 : vector<4x1xi1>, vector<4x1xf32>
    %c0_41 = arith.constant 0 : index
    %c17 = arith.constant 17 : index
    %131 = vector.load %arg5[%c0_41, %c17] : memref<4x358xf32, #tpu.memory_space<vmem>>, vector<4x256xf32>
    %132 = vector.broadcast %130 : vector<4x1xf32> to vector<4x256xf32>
    %133 = arith.mulf %132, %131 : vector<4x256xf32>
    %134 = arith.addf %116, %133 : vector<4x256xf32>
    %c15 = arith.constant 15 : index
    %135 = memref.load %arg2[%c15] : memref<98xf32, #tpu.memory_space<smem>>
    %c64_42 = arith.constant 64 : index
    %136 = memref.load %arg2[%c64_42] : memref<98xf32, #tpu.memory_space<smem>>
    %137 = vector.broadcast %135 : f32 to vector<4x1xf32>
    %138 = vector.broadcast %136 : f32 to vector<4x1xf32>
    %139 = arith.select %31, %137, %138 : vector<4x1xi1>, vector<4x1xf32>
    %c0_43 = arith.constant 0 : index
    %c33 = arith.constant 33 : index
    %140 = vector.load %arg5[%c0_43, %c33] : memref<4x358xf32, #tpu.memory_space<vmem>>, vector<4x256xf32>
    %141 = vector.broadcast %139 : vector<4x1xf32> to vector<4x256xf32>
    %142 = arith.mulf %141, %140 : vector<4x256xf32>
    %143 = arith.addf %125, %142 : vector<4x256xf32>
    %c22 = arith.constant 22 : index
    %144 = memref.load %arg2[%c22] : memref<98xf32, #tpu.memory_space<smem>>
    %c71 = arith.constant 71 : index
    %145 = memref.load %arg2[%c71] : memref<98xf32, #tpu.memory_space<smem>>
    %146 = vector.broadcast %144 : f32 to vector<4x1xf32>
    %147 = vector.broadcast %145 : f32 to vector<4x1xf32>
    %148 = arith.select %31, %146, %147 : vector<4x1xi1>, vector<4x1xf32>
    %c0_44 = arith.constant 0 : index
    %c49_45 = arith.constant 49 : index
    %149 = vector.load %arg5[%c0_44, %c49_45] : memref<4x358xf32, #tpu.memory_space<vmem>>, vector<4x256xf32>
    %150 = vector.broadcast %148 : vector<4x1xf32> to vector<4x256xf32>
    %151 = arith.mulf %150, %149 : vector<4x256xf32>
    %152 = arith.addf %134, %151 : vector<4x256xf32>
    %c29 = arith.constant 29 : index
    %153 = memref.load %arg2[%c29] : memref<98xf32, #tpu.memory_space<smem>>
    %c78 = arith.constant 78 : index
    %154 = memref.load %arg2[%c78] : memref<98xf32, #tpu.memory_space<smem>>
    %155 = vector.broadcast %153 : f32 to vector<4x1xf32>
    %156 = vector.broadcast %154 : f32 to vector<4x1xf32>
    %157 = arith.select %31, %155, %156 : vector<4x1xi1>, vector<4x1xf32>
    %c0_46 = arith.constant 0 : index
    %c65 = arith.constant 65 : index
    %158 = vector.load %arg5[%c0_46, %c65] : memref<4x358xf32, #tpu.memory_space<vmem>>, vector<4x256xf32>
    %159 = vector.broadcast %157 : vector<4x1xf32> to vector<4x256xf32>
    %160 = arith.mulf %159, %158 : vector<4x256xf32>
    %161 = arith.addf %143, %160 : vector<4x256xf32>
    %c36 = arith.constant 36 : index
    %162 = memref.load %arg2[%c36] : memref<98xf32, #tpu.memory_space<smem>>
    %c85 = arith.constant 85 : index
    %163 = memref.load %arg2[%c85] : memref<98xf32, #tpu.memory_space<smem>>
    %164 = vector.broadcast %162 : f32 to vector<4x1xf32>
    %165 = vector.broadcast %163 : f32 to vector<4x1xf32>
    %166 = arith.select %31, %164, %165 : vector<4x1xi1>, vector<4x1xf32>
    %c0_47 = arith.constant 0 : index
    %c81 = arith.constant 81 : index
    %167 = vector.load %arg5[%c0_47, %c81] : memref<4x358xf32, #tpu.memory_space<vmem>>, vector<4x256xf32>
    %168 = vector.broadcast %166 : vector<4x1xf32> to vector<4x256xf32>
    %169 = arith.mulf %168, %167 : vector<4x256xf32>
    %170 = arith.addf %152, %169 : vector<4x256xf32>
    %c43 = arith.constant 43 : index
    %171 = memref.load %arg2[%c43] : memref<98xf32, #tpu.memory_space<smem>>
    %c92 = arith.constant 92 : index
    %172 = memref.load %arg2[%c92] : memref<98xf32, #tpu.memory_space<smem>>
    %173 = vector.broadcast %171 : f32 to vector<4x1xf32>
    %174 = vector.broadcast %172 : f32 to vector<4x1xf32>
    %175 = arith.select %31, %173, %174 : vector<4x1xi1>, vector<4x1xf32>
    %c0_48 = arith.constant 0 : index
    %c97 = arith.constant 97 : index
    %176 = vector.load %arg5[%c0_48, %c97] : memref<4x358xf32, #tpu.memory_space<vmem>>, vector<4x256xf32>
    %177 = vector.broadcast %175 : vector<4x1xf32> to vector<4x256xf32>
    %178 = arith.mulf %177, %176 : vector<4x256xf32>
    %179 = arith.addf %161, %178 : vector<4x256xf32>
    %180 = arith.addf %179, %170 : vector<4x256xf32>
    %cst_49 = arith.constant 0.000000e+00 : f32
    %181 = vector.shape_cast %114 : vector<1x256xi1> to vector<1x256xi1>
    %182 = vector.broadcast %181 : vector<1x256xi1> to vector<4x256xi1>
    %183 = vector.broadcast %cst_49 : f32 to vector<4x256xf32>
    %184 = arith.select %182, %180, %183 : vector<4x256xi1>, vector<4x256xf32>
    %185 = arith.addf %33, %184 : vector<4x256xf32>
    %c1_i32_50 = arith.constant 1 : i32
    %186 = vector.broadcast %c1_i32_50 : i32 to vector<1x256xi32>
    %187 = arith.cmpi sge, %28, %186 : vector<1x256xi32>
    %c17_i32 = arith.constant 17 : i32
    %188 = vector.broadcast %c17_i32 : i32 to vector<1x256xi32>
    %189 = arith.cmpi slt, %28, %188 : vector<1x256xi32>
    %190 = arith.andi %187, %189 : vector<1x256xi1>
    %cst_51 = arith.constant 0.000000e+00 : f32
    %191 = vector.broadcast %cst_51 : f32 to vector<4x256xf32>
    %cst_52 = arith.constant 0.000000e+00 : f32
    %192 = vector.broadcast %cst_52 : f32 to vector<4x256xf32>
    %c2_53 = arith.constant 2 : index
    %193 = memref.load %arg2[%c2_53] : memref<98xf32, #tpu.memory_space<smem>>
    %c51_54 = arith.constant 51 : index
    %194 = memref.load %arg2[%c51_54] : memref<98xf32, #tpu.memory_space<smem>>
    %195 = vector.broadcast %193 : f32 to vector<4x1xf32>
    %196 = vector.broadcast %194 : f32 to vector<4x1xf32>
    %197 = arith.select %31, %195, %196 : vector<4x1xi1>, vector<4x1xf32>
    %c0_55 = arith.constant 0 : index
    %c2_56 = arith.constant 2 : index
    %198 = vector.load %arg5[%c0_55, %c2_56] : memref<4x358xf32, #tpu.memory_space<vmem>>, vector<4x256xf32>
    %199 = vector.broadcast %197 : vector<4x1xf32> to vector<4x256xf32>
    %200 = arith.mulf %199, %198 : vector<4x256xf32>
    %201 = arith.addf %191, %200 : vector<4x256xf32>
    %c9 = arith.constant 9 : index
    %202 = memref.load %arg2[%c9] : memref<98xf32, #tpu.memory_space<smem>>
    %c58 = arith.constant 58 : index
    %203 = memref.load %arg2[%c58] : memref<98xf32, #tpu.memory_space<smem>>
    %204 = vector.broadcast %202 : f32 to vector<4x1xf32>
    %205 = vector.broadcast %203 : f32 to vector<4x1xf32>
    %206 = arith.select %31, %204, %205 : vector<4x1xi1>, vector<4x1xf32>
    %c0_57 = arith.constant 0 : index
    %c18 = arith.constant 18 : index
    %207 = vector.load %arg5[%c0_57, %c18] : memref<4x358xf32, #tpu.memory_space<vmem>>, vector<4x256xf32>
    %208 = vector.broadcast %206 : vector<4x1xf32> to vector<4x256xf32>
    %209 = arith.mulf %208, %207 : vector<4x256xf32>
    %210 = arith.addf %192, %209 : vector<4x256xf32>
    %c16_58 = arith.constant 16 : index
    %211 = memref.load %arg2[%c16_58] : memref<98xf32, #tpu.memory_space<smem>>
    %c65_59 = arith.constant 65 : index
    %212 = memref.load %arg2[%c65_59] : memref<98xf32, #tpu.memory_space<smem>>
    %213 = vector.broadcast %211 : f32 to vector<4x1xf32>
    %214 = vector.broadcast %212 : f32 to vector<4x1xf32>
    %215 = arith.select %31, %213, %214 : vector<4x1xi1>, vector<4x1xf32>
    %c0_60 = arith.constant 0 : index
    %c34 = arith.constant 34 : index
    %216 = vector.load %arg5[%c0_60, %c34] : memref<4x358xf32, #tpu.memory_space<vmem>>, vector<4x256xf32>
    %217 = vector.broadcast %215 : vector<4x1xf32> to vector<4x256xf32>
    %218 = arith.mulf %217, %216 : vector<4x256xf32>
    %219 = arith.addf %201, %218 : vector<4x256xf32>
    %c23 = arith.constant 23 : index
    %220 = memref.load %arg2[%c23] : memref<98xf32, #tpu.memory_space<smem>>
    %c72 = arith.constant 72 : index
    %221 = memref.load %arg2[%c72] : memref<98xf32, #tpu.memory_space<smem>>
    %222 = vector.broadcast %220 : f32 to vector<4x1xf32>
    %223 = vector.broadcast %221 : f32 to vector<4x1xf32>
    %224 = arith.select %31, %222, %223 : vector<4x1xi1>, vector<4x1xf32>
    %c0_61 = arith.constant 0 : index
    %c50_62 = arith.constant 50 : index
    %225 = vector.load %arg5[%c0_61, %c50_62] : memref<4x358xf32, #tpu.memory_space<vmem>>, vector<4x256xf32>
    %226 = vector.broadcast %224 : vector<4x1xf32> to vector<4x256xf32>
    %227 = arith.mulf %226, %225 : vector<4x256xf32>
    %228 = arith.addf %210, %227 : vector<4x256xf32>
    %c30 = arith.constant 30 : index
    %229 = memref.load %arg2[%c30] : memref<98xf32, #tpu.memory_space<smem>>
    %c79 = arith.constant 79 : index
    %230 = memref.load %arg2[%c79] : memref<98xf32, #tpu.memory_space<smem>>
    %231 = vector.broadcast %229 : f32 to vector<4x1xf32>
    %232 = vector.broadcast %230 : f32 to vector<4x1xf32>
    %233 = arith.select %31, %231, %232 : vector<4x1xi1>, vector<4x1xf32>
    %c0_63 = arith.constant 0 : index
    %c66 = arith.constant 66 : index
    %234 = vector.load %arg5[%c0_63, %c66] : memref<4x358xf32, #tpu.memory_space<vmem>>, vector<4x256xf32>
    %235 = vector.broadcast %233 : vector<4x1xf32> to vector<4x256xf32>
    %236 = arith.mulf %235, %234 : vector<4x256xf32>
    %237 = arith.addf %219, %236 : vector<4x256xf32>
    %c37 = arith.constant 37 : index
    %238 = memref.load %arg2[%c37] : memref<98xf32, #tpu.memory_space<smem>>
    %c86 = arith.constant 86 : index
    %239 = memref.load %arg2[%c86] : memref<98xf32, #tpu.memory_space<smem>>
    %240 = vector.broadcast %238 : f32 to vector<4x1xf32>
    %241 = vector.broadcast %239 : f32 to vector<4x1xf32>
    %242 = arith.select %31, %240, %241 : vector<4x1xi1>, vector<4x1xf32>
    %c0_64 = arith.constant 0 : index
    %c82 = arith.constant 82 : index
    %243 = vector.load %arg5[%c0_64, %c82] : memref<4x358xf32, #tpu.memory_space<vmem>>, vector<4x256xf32>
    %244 = vector.broadcast %242 : vector<4x1xf32> to vector<4x256xf32>
    %245 = arith.mulf %244, %243 : vector<4x256xf32>
    %246 = arith.addf %228, %245 : vector<4x256xf32>
    %c44 = arith.constant 44 : index
    %247 = memref.load %arg2[%c44] : memref<98xf32, #tpu.memory_space<smem>>
    %c93 = arith.constant 93 : index
    %248 = memref.load %arg2[%c93] : memref<98xf32, #tpu.memory_space<smem>>
    %249 = vector.broadcast %247 : f32 to vector<4x1xf32>
    %250 = vector.broadcast %248 : f32 to vector<4x1xf32>
    %251 = arith.select %31, %249, %250 : vector<4x1xi1>, vector<4x1xf32>
    %c0_65 = arith.constant 0 : index
    %c98 = arith.constant 98 : index
    %252 = vector.load %arg5[%c0_65, %c98] : memref<4x358xf32, #tpu.memory_space<vmem>>, vector<4x256xf32>
    %253 = vector.broadcast %251 : vector<4x1xf32> to vector<4x256xf32>
    %254 = arith.mulf %253, %252 : vector<4x256xf32>
    %255 = arith.addf %237, %254 : vector<4x256xf32>
    %256 = arith.addf %255, %246 : vector<4x256xf32>
    %cst_66 = arith.constant 0.000000e+00 : f32
    %257 = vector.shape_cast %190 : vector<1x256xi1> to vector<1x256xi1>
    %258 = vector.broadcast %257 : vector<1x256xi1> to vector<4x256xi1>
    %259 = vector.broadcast %cst_66 : f32 to vector<4x256xf32>
    %260 = arith.select %258, %256, %259 : vector<4x256xi1>, vector<4x256xf32>
    %261 = arith.addf %109, %260 : vector<4x256xf32>
    %c0_i32_67 = arith.constant 0 : i32
    %262 = vector.broadcast %c0_i32_67 : i32 to vector<1x256xi32>
    %263 = arith.cmpi sge, %28, %262 : vector<1x256xi32>
    %c16_i32 = arith.constant 16 : i32
    %264 = vector.broadcast %c16_i32 : i32 to vector<1x256xi32>
    %265 = arith.cmpi slt, %28, %264 : vector<1x256xi32>
    %266 = arith.andi %263, %265 : vector<1x256xi1>
    %cst_68 = arith.constant 0.000000e+00 : f32
    %267 = vector.broadcast %cst_68 : f32 to vector<4x256xf32>
    %cst_69 = arith.constant 0.000000e+00 : f32
    %268 = vector.broadcast %cst_69 : f32 to vector<4x256xf32>
    %c3_70 = arith.constant 3 : index
    %269 = memref.load %arg2[%c3_70] : memref<98xf32, #tpu.memory_space<smem>>
    %c52 = arith.constant 52 : index
    %270 = memref.load %arg2[%c52] : memref<98xf32, #tpu.memory_space<smem>>
    %271 = vector.broadcast %269 : f32 to vector<4x1xf32>
    %272 = vector.broadcast %270 : f32 to vector<4x1xf32>
    %273 = arith.select %31, %271, %272 : vector<4x1xi1>, vector<4x1xf32>
    %c0_71 = arith.constant 0 : index
    %c3_72 = arith.constant 3 : index
    %274 = vector.load %arg5[%c0_71, %c3_72] : memref<4x358xf32, #tpu.memory_space<vmem>>, vector<4x256xf32>
    %275 = vector.broadcast %273 : vector<4x1xf32> to vector<4x256xf32>
    %276 = arith.mulf %275, %274 : vector<4x256xf32>
    %277 = arith.addf %267, %276 : vector<4x256xf32>
    %c10 = arith.constant 10 : index
    %278 = memref.load %arg2[%c10] : memref<98xf32, #tpu.memory_space<smem>>
    %c59 = arith.constant 59 : index
    %279 = memref.load %arg2[%c59] : memref<98xf32, #tpu.memory_space<smem>>
    %280 = vector.broadcast %278 : f32 to vector<4x1xf32>
    %281 = vector.broadcast %279 : f32 to vector<4x1xf32>
    %282 = arith.select %31, %280, %281 : vector<4x1xi1>, vector<4x1xf32>
    %c0_73 = arith.constant 0 : index
    %c19 = arith.constant 19 : index
    %283 = vector.load %arg5[%c0_73, %c19] : memref<4x358xf32, #tpu.memory_space<vmem>>, vector<4x256xf32>
    %284 = vector.broadcast %282 : vector<4x1xf32> to vector<4x256xf32>
    %285 = arith.mulf %284, %283 : vector<4x256xf32>
    %286 = arith.addf %268, %285 : vector<4x256xf32>
    %c17_74 = arith.constant 17 : index
    %287 = memref.load %arg2[%c17_74] : memref<98xf32, #tpu.memory_space<smem>>
    %c66_75 = arith.constant 66 : index
    %288 = memref.load %arg2[%c66_75] : memref<98xf32, #tpu.memory_space<smem>>
    %289 = vector.broadcast %287 : f32 to vector<4x1xf32>
    %290 = vector.broadcast %288 : f32 to vector<4x1xf32>
    %291 = arith.select %31, %289, %290 : vector<4x1xi1>, vector<4x1xf32>
    %c0_76 = arith.constant 0 : index
    %c35_77 = arith.constant 35 : index
    %292 = vector.load %arg5[%c0_76, %c35_77] : memref<4x358xf32, #tpu.memory_space<vmem>>, vector<4x256xf32>
    %293 = vector.broadcast %291 : vector<4x1xf32> to vector<4x256xf32>
    %294 = arith.mulf %293, %292 : vector<4x256xf32>
    %295 = arith.addf %277, %294 : vector<4x256xf32>
    %c24 = arith.constant 24 : index
    %296 = memref.load %arg2[%c24] : memref<98xf32, #tpu.memory_space<smem>>
    %c73 = arith.constant 73 : index
    %297 = memref.load %arg2[%c73] : memref<98xf32, #tpu.memory_space<smem>>
    %298 = vector.broadcast %296 : f32 to vector<4x1xf32>
    %299 = vector.broadcast %297 : f32 to vector<4x1xf32>
    %300 = arith.select %31, %298, %299 : vector<4x1xi1>, vector<4x1xf32>
    %c0_78 = arith.constant 0 : index
    %c51_79 = arith.constant 51 : index
    %301 = vector.load %arg5[%c0_78, %c51_79] : memref<4x358xf32, #tpu.memory_space<vmem>>, vector<4x256xf32>
    %302 = vector.broadcast %300 : vector<4x1xf32> to vector<4x256xf32>
    %303 = arith.mulf %302, %301 : vector<4x256xf32>
    %304 = arith.addf %286, %303 : vector<4x256xf32>
    %c31 = arith.constant 31 : index
    %305 = memref.load %arg2[%c31] : memref<98xf32, #tpu.memory_space<smem>>
    %c80_80 = arith.constant 80 : index
    %306 = memref.load %arg2[%c80_80] : memref<98xf32, #tpu.memory_space<smem>>
    %307 = vector.broadcast %305 : f32 to vector<4x1xf32>
    %308 = vector.broadcast %306 : f32 to vector<4x1xf32>
    %309 = arith.select %31, %307, %308 : vector<4x1xi1>, vector<4x1xf32>
    %c0_81 = arith.constant 0 : index
    %c67 = arith.constant 67 : index
    %310 = vector.load %arg5[%c0_81, %c67] : memref<4x358xf32, #tpu.memory_space<vmem>>, vector<4x256xf32>
    %311 = vector.broadcast %309 : vector<4x1xf32> to vector<4x256xf32>
    %312 = arith.mulf %311, %310 : vector<4x256xf32>
    %313 = arith.addf %295, %312 : vector<4x256xf32>
    %c38 = arith.constant 38 : index
    %314 = memref.load %arg2[%c38] : memref<98xf32, #tpu.memory_space<smem>>
    %c87 = arith.constant 87 : index
    %315 = memref.load %arg2[%c87] : memref<98xf32, #tpu.memory_space<smem>>
    %316 = vector.broadcast %314 : f32 to vector<4x1xf32>
    %317 = vector.broadcast %315 : f32 to vector<4x1xf32>
    %318 = arith.select %31, %316, %317 : vector<4x1xi1>, vector<4x1xf32>
    %c0_82 = arith.constant 0 : index
    %c83 = arith.constant 83 : index
    %319 = vector.load %arg5[%c0_82, %c83] : memref<4x358xf32, #tpu.memory_space<vmem>>, vector<4x256xf32>
    %320 = vector.broadcast %318 : vector<4x1xf32> to vector<4x256xf32>
    %321 = arith.mulf %320, %319 : vector<4x256xf32>
    %322 = arith.addf %304, %321 : vector<4x256xf32>
    %c45 = arith.constant 45 : index
    %323 = memref.load %arg2[%c45] : memref<98xf32, #tpu.memory_space<smem>>
    %c94 = arith.constant 94 : index
    %324 = memref.load %arg2[%c94] : memref<98xf32, #tpu.memory_space<smem>>
    %325 = vector.broadcast %323 : f32 to vector<4x1xf32>
    %326 = vector.broadcast %324 : f32 to vector<4x1xf32>
    %327 = arith.select %31, %325, %326 : vector<4x1xi1>, vector<4x1xf32>
    %c0_83 = arith.constant 0 : index
    %c99 = arith.constant 99 : index
    %328 = vector.load %arg5[%c0_83, %c99] : memref<4x358xf32, #tpu.memory_space<vmem>>, vector<4x256xf32>
    %329 = vector.broadcast %327 : vector<4x1xf32> to vector<4x256xf32>
    %330 = arith.mulf %329, %328 : vector<4x256xf32>
    %331 = arith.addf %313, %330 : vector<4x256xf32>
    %332 = arith.addf %331, %322 : vector<4x256xf32>
    %cst_84 = arith.constant 0.000000e+00 : f32
    %333 = vector.shape_cast %266 : vector<1x256xi1> to vector<1x256xi1>
    %334 = vector.broadcast %333 : vector<1x256xi1> to vector<4x256xi1>
    %335 = vector.broadcast %cst_84 : f32 to vector<4x256xf32>
    %336 = arith.select %334, %332, %335 : vector<4x256xi1>, vector<4x256xf32>
    %337 = arith.addf %185, %336 : vector<4x256xf32>
    %c-1_i32 = arith.constant -1 : i32
    %338 = vector.broadcast %c-1_i32 : i32 to vector<1x256xi32>
    %339 = arith.cmpi sge, %28, %338 : vector<1x256xi32>
    %c15_i32_85 = arith.constant 15 : i32
    %340 = vector.broadcast %c15_i32_85 : i32 to vector<1x256xi32>
    %341 = arith.cmpi slt, %28, %340 : vector<1x256xi32>
    %342 = arith.andi %339, %341 : vector<1x256xi1>
    %cst_86 = arith.constant 0.000000e+00 : f32
    %343 = vector.broadcast %cst_86 : f32 to vector<4x256xf32>
    %cst_87 = arith.constant 0.000000e+00 : f32
    %344 = vector.broadcast %cst_87 : f32 to vector<4x256xf32>
    %c4 = arith.constant 4 : index
    %345 = memref.load %arg2[%c4] : memref<98xf32, #tpu.memory_space<smem>>
    %c53 = arith.constant 53 : index
    %346 = memref.load %arg2[%c53] : memref<98xf32, #tpu.memory_space<smem>>
    %347 = vector.broadcast %345 : f32 to vector<4x1xf32>
    %348 = vector.broadcast %346 : f32 to vector<4x1xf32>
    %349 = arith.select %31, %347, %348 : vector<4x1xi1>, vector<4x1xf32>
    %c0_88 = arith.constant 0 : index
    %c4_89 = arith.constant 4 : index
    %350 = vector.load %arg5[%c0_88, %c4_89] : memref<4x358xf32, #tpu.memory_space<vmem>>, vector<4x256xf32>
    %351 = vector.broadcast %349 : vector<4x1xf32> to vector<4x256xf32>
    %352 = arith.mulf %351, %350 : vector<4x256xf32>
    %353 = arith.addf %343, %352 : vector<4x256xf32>
    %c11 = arith.constant 11 : index
    %354 = memref.load %arg2[%c11] : memref<98xf32, #tpu.memory_space<smem>>
    %c60 = arith.constant 60 : index
    %355 = memref.load %arg2[%c60] : memref<98xf32, #tpu.memory_space<smem>>
    %356 = vector.broadcast %354 : f32 to vector<4x1xf32>
    %357 = vector.broadcast %355 : f32 to vector<4x1xf32>
    %358 = arith.select %31, %356, %357 : vector<4x1xi1>, vector<4x1xf32>
    %c0_90 = arith.constant 0 : index
    %c20 = arith.constant 20 : index
    %359 = vector.load %arg5[%c0_90, %c20] : memref<4x358xf32, #tpu.memory_space<vmem>>, vector<4x256xf32>
    %360 = vector.broadcast %358 : vector<4x1xf32> to vector<4x256xf32>
    %361 = arith.mulf %360, %359 : vector<4x256xf32>
    %362 = arith.addf %344, %361 : vector<4x256xf32>
    %c18_91 = arith.constant 18 : index
    %363 = memref.load %arg2[%c18_91] : memref<98xf32, #tpu.memory_space<smem>>
    %c67_92 = arith.constant 67 : index
    %364 = memref.load %arg2[%c67_92] : memref<98xf32, #tpu.memory_space<smem>>
    %365 = vector.broadcast %363 : f32 to vector<4x1xf32>
    %366 = vector.broadcast %364 : f32 to vector<4x1xf32>
    %367 = arith.select %31, %365, %366 : vector<4x1xi1>, vector<4x1xf32>
    %c0_93 = arith.constant 0 : index
    %c36_94 = arith.constant 36 : index
    %368 = vector.load %arg5[%c0_93, %c36_94] : memref<4x358xf32, #tpu.memory_space<vmem>>, vector<4x256xf32>
    %369 = vector.broadcast %367 : vector<4x1xf32> to vector<4x256xf32>
    %370 = arith.mulf %369, %368 : vector<4x256xf32>
    %371 = arith.addf %353, %370 : vector<4x256xf32>
    %c25 = arith.constant 25 : index
    %372 = memref.load %arg2[%c25] : memref<98xf32, #tpu.memory_space<smem>>
    %c74 = arith.constant 74 : index
    %373 = memref.load %arg2[%c74] : memref<98xf32, #tpu.memory_space<smem>>
    %374 = vector.broadcast %372 : f32 to vector<4x1xf32>
    %375 = vector.broadcast %373 : f32 to vector<4x1xf32>
    %376 = arith.select %31, %374, %375 : vector<4x1xi1>, vector<4x1xf32>
    %c0_95 = arith.constant 0 : index
    %c52_96 = arith.constant 52 : index
    %377 = vector.load %arg5[%c0_95, %c52_96] : memref<4x358xf32, #tpu.memory_space<vmem>>, vector<4x256xf32>
    %378 = vector.broadcast %376 : vector<4x1xf32> to vector<4x256xf32>
    %379 = arith.mulf %378, %377 : vector<4x256xf32>
    %380 = arith.addf %362, %379 : vector<4x256xf32>
    %c32_97 = arith.constant 32 : index
    %381 = memref.load %arg2[%c32_97] : memref<98xf32, #tpu.memory_space<smem>>
    %c81_98 = arith.constant 81 : index
    %382 = memref.load %arg2[%c81_98] : memref<98xf32, #tpu.memory_space<smem>>
    %383 = vector.broadcast %381 : f32 to vector<4x1xf32>
    %384 = vector.broadcast %382 : f32 to vector<4x1xf32>
    %385 = arith.select %31, %383, %384 : vector<4x1xi1>, vector<4x1xf32>
    %c0_99 = arith.constant 0 : index
    %c68 = arith.constant 68 : index
    %386 = vector.load %arg5[%c0_99, %c68] : memref<4x358xf32, #tpu.memory_space<vmem>>, vector<4x256xf32>
    %387 = vector.broadcast %385 : vector<4x1xf32> to vector<4x256xf32>
    %388 = arith.mulf %387, %386 : vector<4x256xf32>
    %389 = arith.addf %371, %388 : vector<4x256xf32>
    %c39 = arith.constant 39 : index
    %390 = memref.load %arg2[%c39] : memref<98xf32, #tpu.memory_space<smem>>
    %c88 = arith.constant 88 : index
    %391 = memref.load %arg2[%c88] : memref<98xf32, #tpu.memory_space<smem>>
    %392 = vector.broadcast %390 : f32 to vector<4x1xf32>
    %393 = vector.broadcast %391 : f32 to vector<4x1xf32>
    %394 = arith.select %31, %392, %393 : vector<4x1xi1>, vector<4x1xf32>
    %c0_100 = arith.constant 0 : index
    %c84_101 = arith.constant 84 : index
    %395 = vector.load %arg5[%c0_100, %c84_101] : memref<4x358xf32, #tpu.memory_space<vmem>>, vector<4x256xf32>
    %396 = vector.broadcast %394 : vector<4x1xf32> to vector<4x256xf32>
    %397 = arith.mulf %396, %395 : vector<4x256xf32>
    %398 = arith.addf %380, %397 : vector<4x256xf32>
    %c46 = arith.constant 46 : index
    %399 = memref.load %arg2[%c46] : memref<98xf32, #tpu.memory_space<smem>>
    %c95 = arith.constant 95 : index
    %400 = memref.load %arg2[%c95] : memref<98xf32, #tpu.memory_space<smem>>
    %401 = vector.broadcast %399 : f32 to vector<4x1xf32>
    %402 = vector.broadcast %400 : f32 to vector<4x1xf32>
    %403 = arith.select %31, %401, %402 : vector<4x1xi1>, vector<4x1xf32>
    %c0_102 = arith.constant 0 : index
    %c100 = arith.constant 100 : index
    %404 = vector.load %arg5[%c0_102, %c100] : memref<4x358xf32, #tpu.memory_space<vmem>>, vector<4x256xf32>
    %405 = vector.broadcast %403 : vector<4x1xf32> to vector<4x256xf32>
    %406 = arith.mulf %405, %404 : vector<4x256xf32>
    %407 = arith.addf %389, %406 : vector<4x256xf32>
    %408 = arith.addf %407, %398 : vector<4x256xf32>
    %cst_103 = arith.constant 0.000000e+00 : f32
    %409 = vector.shape_cast %342 : vector<1x256xi1> to vector<1x256xi1>
    %410 = vector.broadcast %409 : vector<1x256xi1> to vector<4x256xi1>
    %411 = vector.broadcast %cst_103 : f32 to vector<4x256xf32>
    %412 = arith.select %410, %408, %411 : vector<4x256xi1>, vector<4x256xf32>
    %413 = arith.addf %261, %412 : vector<4x256xf32>
    %c-2_i32 = arith.constant -2 : i32
    %414 = vector.broadcast %c-2_i32 : i32 to vector<1x256xi32>
    %415 = arith.cmpi sge, %28, %414 : vector<1x256xi32>
    %c14_i32 = arith.constant 14 : i32
    %416 = vector.broadcast %c14_i32 : i32 to vector<1x256xi32>
    %417 = arith.cmpi slt, %28, %416 : vector<1x256xi32>
    %418 = arith.andi %415, %417 : vector<1x256xi1>
    %cst_104 = arith.constant 0.000000e+00 : f32
    %419 = vector.broadcast %cst_104 : f32 to vector<4x256xf32>
    %cst_105 = arith.constant 0.000000e+00 : f32
    %420 = vector.broadcast %cst_105 : f32 to vector<4x256xf32>
    %c5 = arith.constant 5 : index
    %421 = memref.load %arg2[%c5] : memref<98xf32, #tpu.memory_space<smem>>
    %c54 = arith.constant 54 : index
    %422 = memref.load %arg2[%c54] : memref<98xf32, #tpu.memory_space<smem>>
    %423 = vector.broadcast %421 : f32 to vector<4x1xf32>
    %424 = vector.broadcast %422 : f32 to vector<4x1xf32>
    %425 = arith.select %31, %423, %424 : vector<4x1xi1>, vector<4x1xf32>
    %c0_106 = arith.constant 0 : index
    %c5_107 = arith.constant 5 : index
    %426 = vector.load %arg5[%c0_106, %c5_107] : memref<4x358xf32, #tpu.memory_space<vmem>>, vector<4x256xf32>
    %427 = vector.broadcast %425 : vector<4x1xf32> to vector<4x256xf32>
    %428 = arith.mulf %427, %426 : vector<4x256xf32>
    %429 = arith.addf %419, %428 : vector<4x256xf32>
    %c12 = arith.constant 12 : index
    %430 = memref.load %arg2[%c12] : memref<98xf32, #tpu.memory_space<smem>>
    %c61 = arith.constant 61 : index
    %431 = memref.load %arg2[%c61] : memref<98xf32, #tpu.memory_space<smem>>
    %432 = vector.broadcast %430 : f32 to vector<4x1xf32>
    %433 = vector.broadcast %431 : f32 to vector<4x1xf32>
    %434 = arith.select %31, %432, %433 : vector<4x1xi1>, vector<4x1xf32>
    %c0_108 = arith.constant 0 : index
    %c21_109 = arith.constant 21 : index
    %435 = vector.load %arg5[%c0_108, %c21_109] : memref<4x358xf32, #tpu.memory_space<vmem>>, vector<4x256xf32>
    %436 = vector.broadcast %434 : vector<4x1xf32> to vector<4x256xf32>
    %437 = arith.mulf %436, %435 : vector<4x256xf32>
    %438 = arith.addf %420, %437 : vector<4x256xf32>
    %c19_110 = arith.constant 19 : index
    %439 = memref.load %arg2[%c19_110] : memref<98xf32, #tpu.memory_space<smem>>
    %c68_111 = arith.constant 68 : index
    %440 = memref.load %arg2[%c68_111] : memref<98xf32, #tpu.memory_space<smem>>
    %441 = vector.broadcast %439 : f32 to vector<4x1xf32>
    %442 = vector.broadcast %440 : f32 to vector<4x1xf32>
    %443 = arith.select %31, %441, %442 : vector<4x1xi1>, vector<4x1xf32>
    %c0_112 = arith.constant 0 : index
    %c37_113 = arith.constant 37 : index
    %444 = vector.load %arg5[%c0_112, %c37_113] : memref<4x358xf32, #tpu.memory_space<vmem>>, vector<4x256xf32>
    %445 = vector.broadcast %443 : vector<4x1xf32> to vector<4x256xf32>
    %446 = arith.mulf %445, %444 : vector<4x256xf32>
    %447 = arith.addf %429, %446 : vector<4x256xf32>
    %c26 = arith.constant 26 : index
    %448 = memref.load %arg2[%c26] : memref<98xf32, #tpu.memory_space<smem>>
    %c75 = arith.constant 75 : index
    %449 = memref.load %arg2[%c75] : memref<98xf32, #tpu.memory_space<smem>>
    %450 = vector.broadcast %448 : f32 to vector<4x1xf32>
    %451 = vector.broadcast %449 : f32 to vector<4x1xf32>
    %452 = arith.select %31, %450, %451 : vector<4x1xi1>, vector<4x1xf32>
    %c0_114 = arith.constant 0 : index
    %c53_115 = arith.constant 53 : index
    %453 = vector.load %arg5[%c0_114, %c53_115] : memref<4x358xf32, #tpu.memory_space<vmem>>, vector<4x256xf32>
    %454 = vector.broadcast %452 : vector<4x1xf32> to vector<4x256xf32>
    %455 = arith.mulf %454, %453 : vector<4x256xf32>
    %456 = arith.addf %438, %455 : vector<4x256xf32>
    %c33_116 = arith.constant 33 : index
    %457 = memref.load %arg2[%c33_116] : memref<98xf32, #tpu.memory_space<smem>>
    %c82_117 = arith.constant 82 : index
    %458 = memref.load %arg2[%c82_117] : memref<98xf32, #tpu.memory_space<smem>>
    %459 = vector.broadcast %457 : f32 to vector<4x1xf32>
    %460 = vector.broadcast %458 : f32 to vector<4x1xf32>
    %461 = arith.select %31, %459, %460 : vector<4x1xi1>, vector<4x1xf32>
    %c0_118 = arith.constant 0 : index
    %c69 = arith.constant 69 : index
    %462 = vector.load %arg5[%c0_118, %c69] : memref<4x358xf32, #tpu.memory_space<vmem>>, vector<4x256xf32>
    %463 = vector.broadcast %461 : vector<4x1xf32> to vector<4x256xf32>
    %464 = arith.mulf %463, %462 : vector<4x256xf32>
    %465 = arith.addf %447, %464 : vector<4x256xf32>
    %c40 = arith.constant 40 : index
    %466 = memref.load %arg2[%c40] : memref<98xf32, #tpu.memory_space<smem>>
    %c89 = arith.constant 89 : index
    %467 = memref.load %arg2[%c89] : memref<98xf32, #tpu.memory_space<smem>>
    %468 = vector.broadcast %466 : f32 to vector<4x1xf32>
    %469 = vector.broadcast %467 : f32 to vector<4x1xf32>
    %470 = arith.select %31, %468, %469 : vector<4x1xi1>, vector<4x1xf32>
    %c0_119 = arith.constant 0 : index
    %c85_120 = arith.constant 85 : index
    %471 = vector.load %arg5[%c0_119, %c85_120] : memref<4x358xf32, #tpu.memory_space<vmem>>, vector<4x256xf32>
    %472 = vector.broadcast %470 : vector<4x1xf32> to vector<4x256xf32>
    %473 = arith.mulf %472, %471 : vector<4x256xf32>
    %474 = arith.addf %456, %473 : vector<4x256xf32>
    %c47 = arith.constant 47 : index
    %475 = memref.load %arg2[%c47] : memref<98xf32, #tpu.memory_space<smem>>
    %c96_121 = arith.constant 96 : index
    %476 = memref.load %arg2[%c96_121] : memref<98xf32, #tpu.memory_space<smem>>
    %477 = vector.broadcast %475 : f32 to vector<4x1xf32>
    %478 = vector.broadcast %476 : f32 to vector<4x1xf32>
    %479 = arith.select %31, %477, %478 : vector<4x1xi1>, vector<4x1xf32>
    %c0_122 = arith.constant 0 : index
    %c101 = arith.constant 101 : index
    %480 = vector.load %arg5[%c0_122, %c101] : memref<4x358xf32, #tpu.memory_space<vmem>>, vector<4x256xf32>
    %481 = vector.broadcast %479 : vector<4x1xf32> to vector<4x256xf32>
    %482 = arith.mulf %481, %480 : vector<4x256xf32>
    %483 = arith.addf %465, %482 : vector<4x256xf32>
    %484 = arith.addf %483, %474 : vector<4x256xf32>
    %cst_123 = arith.constant 0.000000e+00 : f32
    %485 = vector.shape_cast %418 : vector<1x256xi1> to vector<1x256xi1>
    %486 = vector.broadcast %485 : vector<1x256xi1> to vector<4x256xi1>
    %487 = vector.broadcast %cst_123 : f32 to vector<4x256xf32>
    %488 = arith.select %486, %484, %487 : vector<4x256xi1>, vector<4x256xf32>
    %489 = arith.addf %337, %488 : vector<4x256xf32>
    %c-3_i32 = arith.constant -3 : i32
    %490 = vector.broadcast %c-3_i32 : i32 to vector<1x256xi32>
    %491 = arith.cmpi sge, %28, %490 : vector<1x256xi32>
    %c13_i32 = arith.constant 13 : i32
    %492 = vector.broadcast %c13_i32 : i32 to vector<1x256xi32>
    %493 = arith.cmpi slt, %28, %492 : vector<1x256xi32>
    %494 = arith.andi %491, %493 : vector<1x256xi1>
    %cst_124 = arith.constant 0.000000e+00 : f32
    %495 = vector.broadcast %cst_124 : f32 to vector<4x256xf32>
    %cst_125 = arith.constant 0.000000e+00 : f32
    %496 = vector.broadcast %cst_125 : f32 to vector<4x256xf32>
    %c6 = arith.constant 6 : index
    %497 = memref.load %arg2[%c6] : memref<98xf32, #tpu.memory_space<smem>>
    %c55 = arith.constant 55 : index
    %498 = memref.load %arg2[%c55] : memref<98xf32, #tpu.memory_space<smem>>
    %499 = vector.broadcast %497 : f32 to vector<4x1xf32>
    %500 = vector.broadcast %498 : f32 to vector<4x1xf32>
    %501 = arith.select %31, %499, %500 : vector<4x1xi1>, vector<4x1xf32>
    %c0_126 = arith.constant 0 : index
    %c6_127 = arith.constant 6 : index
    %502 = vector.load %arg5[%c0_126, %c6_127] : memref<4x358xf32, #tpu.memory_space<vmem>>, vector<4x256xf32>
    %503 = vector.broadcast %501 : vector<4x1xf32> to vector<4x256xf32>
    %504 = arith.mulf %503, %502 : vector<4x256xf32>
    %505 = arith.addf %495, %504 : vector<4x256xf32>
    %c13 = arith.constant 13 : index
    %506 = memref.load %arg2[%c13] : memref<98xf32, #tpu.memory_space<smem>>
    %c62 = arith.constant 62 : index
    %507 = memref.load %arg2[%c62] : memref<98xf32, #tpu.memory_space<smem>>
    %508 = vector.broadcast %506 : f32 to vector<4x1xf32>
    %509 = vector.broadcast %507 : f32 to vector<4x1xf32>
    %510 = arith.select %31, %508, %509 : vector<4x1xi1>, vector<4x1xf32>
    %c0_128 = arith.constant 0 : index
    %c22_129 = arith.constant 22 : index
    %511 = vector.load %arg5[%c0_128, %c22_129] : memref<4x358xf32, #tpu.memory_space<vmem>>, vector<4x256xf32>
    %512 = vector.broadcast %510 : vector<4x1xf32> to vector<4x256xf32>
    %513 = arith.mulf %512, %511 : vector<4x256xf32>
    %514 = arith.addf %496, %513 : vector<4x256xf32>
    %c20_130 = arith.constant 20 : index
    %515 = memref.load %arg2[%c20_130] : memref<98xf32, #tpu.memory_space<smem>>
    %c69_131 = arith.constant 69 : index
    %516 = memref.load %arg2[%c69_131] : memref<98xf32, #tpu.memory_space<smem>>
    %517 = vector.broadcast %515 : f32 to vector<4x1xf32>
    %518 = vector.broadcast %516 : f32 to vector<4x1xf32>
    %519 = arith.select %31, %517, %518 : vector<4x1xi1>, vector<4x1xf32>
    %c0_132 = arith.constant 0 : index
    %c38_133 = arith.constant 38 : index
    %520 = vector.load %arg5[%c0_132, %c38_133] : memref<4x358xf32, #tpu.memory_space<vmem>>, vector<4x256xf32>
    %521 = vector.broadcast %519 : vector<4x1xf32> to vector<4x256xf32>
    %522 = arith.mulf %521, %520 : vector<4x256xf32>
    %523 = arith.addf %505, %522 : vector<4x256xf32>
    %c27 = arith.constant 27 : index
    %524 = memref.load %arg2[%c27] : memref<98xf32, #tpu.memory_space<smem>>
    %c76 = arith.constant 76 : index
    %525 = memref.load %arg2[%c76] : memref<98xf32, #tpu.memory_space<smem>>
    %526 = vector.broadcast %524 : f32 to vector<4x1xf32>
    %527 = vector.broadcast %525 : f32 to vector<4x1xf32>
    %528 = arith.select %31, %526, %527 : vector<4x1xi1>, vector<4x1xf32>
    %c0_134 = arith.constant 0 : index
    %c54_135 = arith.constant 54 : index
    %529 = vector.load %arg5[%c0_134, %c54_135] : memref<4x358xf32, #tpu.memory_space<vmem>>, vector<4x256xf32>
    %530 = vector.broadcast %528 : vector<4x1xf32> to vector<4x256xf32>
    %531 = arith.mulf %530, %529 : vector<4x256xf32>
    %532 = arith.addf %514, %531 : vector<4x256xf32>
    %c34_136 = arith.constant 34 : index
    %533 = memref.load %arg2[%c34_136] : memref<98xf32, #tpu.memory_space<smem>>
    %c83_137 = arith.constant 83 : index
    %534 = memref.load %arg2[%c83_137] : memref<98xf32, #tpu.memory_space<smem>>
    %535 = vector.broadcast %533 : f32 to vector<4x1xf32>
    %536 = vector.broadcast %534 : f32 to vector<4x1xf32>
    %537 = arith.select %31, %535, %536 : vector<4x1xi1>, vector<4x1xf32>
    %c0_138 = arith.constant 0 : index
    %c70_139 = arith.constant 70 : index
    %538 = vector.load %arg5[%c0_138, %c70_139] : memref<4x358xf32, #tpu.memory_space<vmem>>, vector<4x256xf32>
    %539 = vector.broadcast %537 : vector<4x1xf32> to vector<4x256xf32>
    %540 = arith.mulf %539, %538 : vector<4x256xf32>
    %541 = arith.addf %523, %540 : vector<4x256xf32>
    %c41 = arith.constant 41 : index
    %542 = memref.load %arg2[%c41] : memref<98xf32, #tpu.memory_space<smem>>
    %c90 = arith.constant 90 : index
    %543 = memref.load %arg2[%c90] : memref<98xf32, #tpu.memory_space<smem>>
    %544 = vector.broadcast %542 : f32 to vector<4x1xf32>
    %545 = vector.broadcast %543 : f32 to vector<4x1xf32>
    %546 = arith.select %31, %544, %545 : vector<4x1xi1>, vector<4x1xf32>
    %c0_140 = arith.constant 0 : index
    %c86_141 = arith.constant 86 : index
    %547 = vector.load %arg5[%c0_140, %c86_141] : memref<4x358xf32, #tpu.memory_space<vmem>>, vector<4x256xf32>
    %548 = vector.broadcast %546 : vector<4x1xf32> to vector<4x256xf32>
    %549 = arith.mulf %548, %547 : vector<4x256xf32>
    %550 = arith.addf %532, %549 : vector<4x256xf32>
    %c48_142 = arith.constant 48 : index
    %551 = memref.load %arg2[%c48_142] : memref<98xf32, #tpu.memory_space<smem>>
    %c97_143 = arith.constant 97 : index
    %552 = memref.load %arg2[%c97_143] : memref<98xf32, #tpu.memory_space<smem>>
    %553 = vector.broadcast %551 : f32 to vector<4x1xf32>
    %554 = vector.broadcast %552 : f32 to vector<4x1xf32>
    %555 = arith.select %31, %553, %554 : vector<4x1xi1>, vector<4x1xf32>
    %c0_144 = arith.constant 0 : index
    %c102 = arith.constant 102 : index
    %556 = vector.load %arg5[%c0_144, %c102] : memref<4x358xf32, #tpu.memory_space<vmem>>, vector<4x256xf32>
    %557 = vector.broadcast %555 : vector<4x1xf32> to vector<4x256xf32>
    %558 = arith.mulf %557, %556 : vector<4x256xf32>
    %559 = arith.addf %541, %558 : vector<4x256xf32>
    %560 = arith.addf %559, %550 : vector<4x256xf32>
    %cst_145 = arith.constant 0.000000e+00 : f32
    %561 = vector.shape_cast %494 : vector<1x256xi1> to vector<1x256xi1>
    %562 = vector.broadcast %561 : vector<1x256xi1> to vector<4x256xi1>
    %563 = vector.broadcast %cst_145 : f32 to vector<4x256xf32>
    %564 = arith.select %562, %560, %563 : vector<4x256xi1>, vector<4x256xf32>
    %565 = arith.addf %413, %564 : vector<4x256xf32>
    %566 = arith.addf %565, %489 : vector<4x256xf32>
    %567 = vector.extract_strided_slice %566 {offsets = [0, 0], sizes = [2, 256], strides = [1, 1]} : vector<4x256xf32> to vector<2x256xf32>
    %568 = vector.extract_strided_slice %566 {offsets = [2, 0], sizes = [2, 256], strides = [1, 1]} : vector<4x256xf32> to vector<2x256xf32>
    %569 = arith.addf %567, %568 : vector<2x256xf32>
    %c0_146 = arith.constant 0 : index
    %570 = memref.load %arg3[%c0_146] : memref<1xf32, #tpu.memory_space<smem>>
    %571 = vector.broadcast %570 : f32 to vector<2x256xf32>
    %572 = arith.addf %569, %571 : vector<2x256xf32>
    %573 = arith.negf %572 : vector<2x256xf32>
    %574 = math.exp %573 : vector<2x256xf32>
    %cst_147 = arith.constant 1.000000e+00 : f32
    %575 = vector.broadcast %cst_147 : f32 to vector<2x256xf32>
    %576 = arith.addf %575, %574 : vector<2x256xf32>
    %577 = arith.divf %575, %576 : vector<2x256xf32>
    %c0_148 = arith.constant 0 : index
    %c0_149 = arith.constant 0 : index
    %578 = vector.load %arg6[%c0_148, %c0_149] : memref<2x256xf32, #tpu.memory_space<vmem>>, vector<2x256xf32>
    tpu.vector_store %arg6[%c0_148, %c0_149], %577 {strides = array<i32>} : memref<2x256xf32, #tpu.memory_space<vmem>>, vector<2x256xf32>,
    %c0_150 = arith.constant 0 : index
    %c0_151 = arith.constant 0 : index
    %579 = vector.load %arg6[%c0_150, %c0_151] : memref<2x256xf32, #tpu.memory_space<vmem>>, vector<1x256xf32>
    %c0_i32_152 = arith.constant 0 : i32
    %c0_i32_153 = arith.constant 0 : i32
    %c0_i32_154 = arith.constant 0 : i32
    %580 = tpu.memref_slice %arg1[%c0_i32_152, %c0_i32_153, %c0_i32_154] : memref<2x4x256xf32, #tpu.memory_space<vmem>> -> memref<1x4x256xf32, #tpu.memory_space<vmem>>
    %581 = tpu.memref_squeeze %580 : memref<1x4x256xf32, #tpu.memory_space<vmem>> -> memref<4x256xf32, #tpu.memory_space<vmem>>
    %c0_155 = arith.constant 0 : index
    %c0_156 = arith.constant 0 : index
    %582 = vector.load %581[%c0_155, %c0_156] : memref<4x256xf32, #tpu.memory_space<vmem>>, vector<4x256xf32>
    %583 = vector.broadcast %579 : vector<1x256xf32> to vector<4x256xf32>
    %584 = arith.mulf %582, %583 : vector<4x256xf32>
    %c0_i32_157 = arith.constant 0 : i32
    %c0_i32_158 = arith.constant 0 : i32
    %c0_i32_159 = arith.constant 0 : i32
    %585 = tpu.memref_slice %arg4[%c0_i32_157, %c0_i32_158, %c0_i32_159] : memref<2x4x256xf32, #tpu.memory_space<vmem>> -> memref<1x4x256xf32, #tpu.memory_space<vmem>>
    %586 = tpu.memref_squeeze %585 : memref<1x4x256xf32, #tpu.memory_space<vmem>> -> memref<4x256xf32, #tpu.memory_space<vmem>>
    %c0_160 = arith.constant 0 : index
    %c0_161 = arith.constant 0 : index
    %587 = vector.load %586[%c0_160, %c0_161] : memref<4x256xf32, #tpu.memory_space<vmem>>, vector<4x256xf32>
    tpu.vector_store %586[%c0_160, %c0_161], %584 {strides = array<i32>} : memref<4x256xf32, #tpu.memory_space<vmem>>, vector<4x256xf32>,
    %c1_162 = arith.constant 1 : index
    %c0_163 = arith.constant 0 : index
    %588 = vector.load %arg6[%c1_162, %c0_163] : memref<2x256xf32, #tpu.memory_space<vmem>>, vector<1x256xf32>
    %c1_i32_164 = arith.constant 1 : i32
    %c0_i32_165 = arith.constant 0 : i32
    %c0_i32_166 = arith.constant 0 : i32
    %589 = tpu.memref_slice %arg1[%c1_i32_164, %c0_i32_165, %c0_i32_166] : memref<2x4x256xf32, #tpu.memory_space<vmem>> -> memref<1x4x256xf32, #tpu.memory_space<vmem>>
    %590 = tpu.memref_squeeze %589 : memref<1x4x256xf32, #tpu.memory_space<vmem>> -> memref<4x256xf32, #tpu.memory_space<vmem>>
    %c0_167 = arith.constant 0 : index
    %c0_168 = arith.constant 0 : index
    %591 = vector.load %590[%c0_167, %c0_168] : memref<4x256xf32, #tpu.memory_space<vmem>>, vector<4x256xf32>
    %592 = vector.broadcast %588 : vector<1x256xf32> to vector<4x256xf32>
    %593 = arith.mulf %591, %592 : vector<4x256xf32>
    %c1_i32_169 = arith.constant 1 : i32
    %c0_i32_170 = arith.constant 0 : i32
    %c0_i32_171 = arith.constant 0 : i32
    %594 = tpu.memref_slice %arg4[%c1_i32_169, %c0_i32_170, %c0_i32_171] : memref<2x4x256xf32, #tpu.memory_space<vmem>> -> memref<1x4x256xf32, #tpu.memory_space<vmem>>
    %595 = tpu.memref_squeeze %594 : memref<1x4x256xf32, #tpu.memory_space<vmem>> -> memref<4x256xf32, #tpu.memory_space<vmem>>
    %c0_172 = arith.constant 0 : index
    %c0_173 = arith.constant 0 : index
    %596 = vector.load %595[%c0_172, %c0_173] : memref<4x256xf32, #tpu.memory_space<vmem>>, vector<4x256xf32>
    tpu.vector_store %595[%c0_172, %c0_173], %593 {strides = array<i32>} : memref<4x256xf32, #tpu.memory_space<vmem>>, vector<4x256xf32>,
    return
  }
  func.func @transform_0(%arg0: i32) -> (i32, i32, i32) {
    %c0_i32 = arith.constant 0 : i32
    %c0_i32_0 = arith.constant 0 : i32
    %c0_i32_1 = arith.constant 0 : i32
    return %arg0, %c0_i32, %c0_i32_0 : i32, i32, i32
  }
  func.func @transform_1(%arg0: i32) -> i32 {
    %c0_i32 = arith.constant 0 : i32
    %c0_i32_0 = arith.constant 0 : i32
    return %c0_i32 : i32
  }
  func.func @transform_2(%arg0: i32) -> i32 {
    %c0_i32 = arith.constant 0 : i32
    %c0_i32_0 = arith.constant 0 : i32
    return %c0_i32 : i32
  }
  func.func @transform_3(%arg0: i32) -> (i32, i32, i32) {
    %c0_i32 = arith.constant 0 : i32
    %c0_i32_0 = arith.constant 0 : i32
    %c0_i32_1 = arith.constant 0 : i32
    return %arg0, %c0_i32, %c0_i32_0 : i32, i32, i32
  }
}

</mosaic_0001>

<llo_original>
// kernel: tpu_custom_call.1
$region0: #{tpu_custom_call.1}
  #allocation0 [shape = 'u32[]', space=smem, size = 0x4, offset = 0x4, fixed_abs, tag = 'smem constant byte address 0x4 - core index']
  #allocation1 [shape = 'u32[144,128]{1,0:T(1,128)}', space=vmem, size = 0x12000, scoped, tag = 'internal scratch']
  #allocation2 [shape = 'f32[4,358]{1,0:T(4,128)}', space=vmem, size = 0x1800, scoped, tag = 'scratch operand']
  #allocation3 [shape = 'f32[2,256]{1,0:T(2,128)}', space=vmem, size = 0x800, scoped, tag = 'scratch operand']
  #allocation4 [shape = 'f32[1]{0:T(128)S(6)}', space=smem, size = 0x200, scoped, tag = 'scoped memory for tpu_custom_call.1']
  %s0 = inlined_call_operand.hbm [shape: f32[2,4,256], index: 0, kind: input, shape index: {}]
  %s1 = inlined_call_operand.hbm [shape: f32[98], index: 1, kind: input, shape index: {}]
  %s2 = inlined_call_operand.<no memory space> [shape: f32[1], index: 2, kind: input, shape index: {}]
  %s3 = inlined_call_operand.hbm [shape: f32[2,4,256], index: 3, kind: output, shape index: {}]
  %s4 = sld [smem:[#allocation0]]
  $region30: #{tpu_custom_call.1} parent=0
    _
  %s6 = ssub.s32 1, %s4
  %s7 = scalar_select 0, %s6, %s4
  %8 = sst [smem:[#allocation4]] %s2
  $region1: #{tpu_custom_call.1} parent=0
    #allocation5 [shape = 'u8[8192]{0}', space=vmem, size = 0x2000, scoped, tag = 'input window, operand 0, single buffered']
    #allocation6 [shape = 's32[1]{0}', space=sflag, size = 0x4, scoped, tag = 'scoped memory for tpu_custom_call.1']
    #allocation7 [shape = 's32[1]{0}', space=sflag, size = 0x4, scoped, tag = 'scoped memory for tpu_custom_call.1']
    #allocation8 [shape = 's32[1]{0}', space=sflag, size = 0x4, scoped, tag = 'scoped memory for tpu_custom_call.1']
    #allocation9 [shape = 'u8[512]{0}', space=smem, size = 0x200, scoped, tag = 'input window, operand 1, single buffered']
    #allocation10 [shape = 'u8[8192]{0}', space=vmem, size = 0x2000, scoped, tag = 'output window, operand 0, single buffered']
    %9 = vsyncpa [#allocation6], 0
    %10 = vsyncpa [#allocation8], 0
    %11 = vsyncpa [#allocation7], 0
    // Predicated region
    $region2: #{tpu_custom_call.1} parent=1 // pred_check
      _
    $region3: #{tpu_custom_call.1} parent=1 // pred_check_branch
      %13 = sbr.rel (0) target = $region5
    $region4: #{tpu_custom_call.1} parent=1 // pred_region
      %s15 = ssub.s32 256, 256
      %16 = vsyncadd [#allocation6], %s15
      %s17 = sshll.u32 [#allocation5], 4
      %s18 = int_to_ptr.vmem [resolvable:$true] %s17
      %23 = dma.hbm_to_vmem [thread:$0]  %s0, 256, %s18, [#allocation6], 128, 128, 8
    $region5: #{tpu_custom_call.1} parent=1 // pred_fallthru
      _
    // Predicated region
    $region6: #{tpu_custom_call.1} parent=1 // pred_check
      _
    $region7: #{tpu_custom_call.1} parent=1 // pred_check_branch
      %25 = sbr.rel (0) target = $region9
    $region8: #{tpu_custom_call.1} parent=1 // pred_region
      %s27 = ssub.s32 16, 16
      %28 = vsyncadd [#allocation8], %s27
      %31 = dma.hbm_to_smem %s1, 16, [#allocation9], [#allocation8]
    $region9: #{tpu_custom_call.1} parent=1 // pred_fallthru
      _
    // Predicated region
    $region10: #{tpu_custom_call.1} parent=1 // pred_check
      _
    $region11: #{tpu_custom_call.1} parent=1 // pred_check_branch
      %33 = sbr.rel (0) target = $region13
    $region12: #{tpu_custom_call.1} parent=1 // pred_region
      _
    $region13: #{tpu_custom_call.1} parent=1 // pred_fallthru
      _
    // Predicated region
    $region14: #{tpu_custom_call.1} parent=1 // pred_check
      _
    $region15: #{tpu_custom_call.1} parent=1 // pred_check_branch
      %35 = sbr.rel (0) target = $region17
    $region16: #{tpu_custom_call.1} parent=1 // pred_region
      %36 = dma.done [#allocation6], 256
    $region17: #{tpu_custom_call.1} parent=1 // pred_fallthru
      _
    // Predicated region
    $region18: #{tpu_custom_call.1} parent=1 // pred_check
      _
    $region19: #{tpu_custom_call.1} parent=1 // pred_check_branch
      %38 = sbr.rel (0) target = $region21
    $region20: #{tpu_custom_call.1} parent=1 // pred_region
      %39 = dma.done [#allocation8], 16
    $region21: #{tpu_custom_call.1} parent=1 // pred_fallthru
      _
    %40 = sfence
    %vm41 = vcmask 412672
    %42 = vst.msk [vmem:[#allocation2] sm:$0xf] %vm41, 0.0
    %vm43 = vcmask 830872
    %44 = vst.msk [vmem:[#allocation2 + $0x8] sm:$0xf] %vm43, 0.0
    %v45 = vld [vmem:[#allocation5] sm:$0xff]
    %v47 = vcombine.high %v45, %v45
    %vm49 = vcmask 1043456
    %v50 = vsel %vm49, %v45, -inf
    %v51 = vrot.slane %v50, 4
    %v52 = vmax.f32 %v50, %v51
    %v53 = vrot.slane %v52, 2
    %v54 = vmax.f32 %v52, %v53
    %v55 = vrot.slane %v54, 1
    %v56 = vmax.f32 %v54, %v55
    %v57 = vsel %vm49, %v47, -inf
    %v58 = vrot.slane %v57, 4
    %v59 = vmax.f32 %v57, %v58
    %v60 = vrot.slane %v59, 2
    %v61 = vmax.f32 %v59, %v60
    %v62 = vrot.slane %v61, 1
    %v63 = vmax.f32 %v61, %v62
    %v64 = vsel %vm49, %v45, 0.0
    %v65 = vrot.slane %v64, 4
    %v66 = vadd.f32 %v64, %v65
    %v67 = vrot.slane %v66, 2
    %v68 = vadd.f32 %v66, %v67
    %v69 = vrot.slane %v68, 1
    %v70 = vadd.f32 %v68, %v69
    %v71 = vsel %vm49, %v47, 0.0
    %v72 = vrot.slane %v71, 4
    %v73 = vadd.f32 %v71, %v72
    %v74 = vrot.slane %v73, 2
    %v75 = vadd.f32 %v73, %v74
    %v76 = vrot.slane %v75, 1
    %v77 = vadd.f32 %v75, %v76
    %v78 = vmul.f32 %v70, 0.25
    %v79 = vmul.f32 %v77, 0.25
    %v82 = vcombine.low %v56, %v63
    %v84 = vunpack.c.l.s4 1966171168
    %v85 = vunpack.c.0.s8 %v84
    %v86 = vlaneseq
    %v87 = vshrl.u32 %v86, 7
    %v88 = vsub.s32 %v85, %v87
    %v89 = vrot.slane %v82, %v88
    %v91 = vunpack.c.l.s4 1966171168
    %v92 = vunpack.c.0.s8 %v91
    %v93 = vlaneseq
    %v94 = vshrl.u32 %v93, 7
    %v95 = vsub.s32 %v92, %v94
    %v96 = vrot.slane %v89, %v95
    %97 = vrot.lane.b32.xlu0 %v96, 51
    %v98 = vpop.permute.xlu0 %97
    %v99 = vrot.slane %v98, 7
    %vm100 = vcmask 416768
    %v101 = vsel %vm100, %v99, %v98
    %v103 = vlaneseq
    %vm104 = vcmp.ge.s32.totalorder %v103, 51
    %vm105 = vcmp.lt.s32.totalorder %v103, 307
    %vm106 = vmand %vm104, %vm105
    %107 = vst.msk [vmem:[#allocation2] ss:$4 sm:$0x7] %vm106, %v101
    %v110 = vcombine.low %v78, %v79
    %v112 = vunpack.c.l.s4 1966171168
    %v113 = vunpack.c.0.s8 %v112
    %v114 = vlaneseq
    %v115 = vshrl.u32 %v114, 7
    %v116 = vsub.s32 %v113, %v115
    %v117 = vrot.slane %v110, %v116
    %v119 = vunpack.c.l.s4 1966171168
    %v120 = vunpack.c.0.s8 %v119
    %v121 = vlaneseq
    %v122 = vshrl.u32 %v121, 7
    %v123 = vsub.s32 %v120, %v122
    %v124 = vrot.slane %v117, %v123
    %125 = vrot.lane.b32.xlu0 %v124, 51
    %v126 = vpop.permute.xlu0 %125
    %v127 = vrot.slane %v126, 7
    %v128 = vsel %vm100, %v127, %v126
    %s130 = scalar_lea.vmem [#allocation2], 2
    %131 = vst.msk [vmem:[%s130] ss:$4 sm:$0x7] %vm106, %v128
    %s132 = scalar_lea.vmem [#allocation5], 8
    %v133 = vld [vmem:[%s132] sm:$0xff]
    %v135 = vcombine.high %v133, %v133
    %v137 = vsel %vm49, %v133, -inf
    %v138 = vrot.slane %v137, 4
    %v139 = vmax.f32 %v137, %v138
    %v140 = vrot.slane %v139, 2
    %v141 = vmax.f32 %v139, %v140
    %v142 = vrot.slane %v141, 1
    %v143 = vmax.f32 %v141, %v142
    %v144 = vsel %vm49, %v135, -inf
    %v145 = vrot.slane %v144, 4
    %v146 = vmax.f32 %v144, %v145
    %v147 = vrot.slane %v146, 2
    %v148 = vmax.f32 %v146, %v147
    %v149 = vrot.slane %v148, 1
    %v150 = vmax.f32 %v148, %v149
    %v151 = vsel %vm49, %v133, 0.0
    %v152 = vrot.slane %v151, 4
    %v153 = vadd.f32 %v151, %v152
    %v154 = vrot.slane %v153, 2
    %v155 = vadd.f32 %v153, %v154
    %v156 = vrot.slane %v155, 1
    %v157 = vadd.f32 %v155, %v156
    %v158 = vsel %vm49, %v135, 0.0
    %v159 = vrot.slane %v158, 4
    %v160 = vadd.f32 %v158, %v159
    %v161 = vrot.slane %v160, 2
    %v162 = vadd.f32 %v160, %v161
    %v163 = vrot.slane %v162, 1
    %v164 = vadd.f32 %v162, %v163
    %v165 = vmul.f32 %v157, 0.25
    %v166 = vmul.f32 %v164, 0.25
    %v169 = vcombine.low %v143, %v150
    %v171 = vunpack.c.l.s4 1966171168
    %v172 = vunpack.c.0.s8 %v171
    %v173 = vlaneseq
    %v174 = vshrl.u32 %v173, 7
    %v175 = vsub.s32 %v172, %v174
    %v176 = vrot.slane %v169, %v175
    %v178 = vunpack.c.l.s4 1966171168
    %v179 = vunpack.c.0.s8 %v178
    %v180 = vlaneseq
    %v181 = vshrl.u32 %v180, 7
    %v182 = vsub.s32 %v179, %v181
    %v183 = vrot.slane %v176, %v182
    %184 = vrot.lane.b32.xlu0 %v183, 51
    %v185 = vpop.permute.xlu0 %184
    %v186 = vrot.slane %v185, 7
    %v187 = vsel %vm100, %v186, %v185
    %s189 = scalar_lea.vmem [#allocation2], 1
    %190 = vst.msk [vmem:[%s189] ss:$4 sm:$0x7] %vm106, %v187
    %v193 = vcombine.low %v165, %v166
    %v195 = vunpack.c.l.s4 1966171168
    %v196 = vunpack.c.0.s8 %v195
    %v197 = vlaneseq
    %v198 = vshrl.u32 %v197, 7
    %v199 = vsub.s32 %v196, %v198
    %v200 = vrot.slane %v193, %v199
    %v202 = vunpack.c.l.s4 1966171168
    %v203 = vunpack.c.0.s8 %v202
    %v204 = vlaneseq
    %v205 = vshrl.u32 %v204, 7
    %v206 = vsub.s32 %v203, %v205
    %v207 = vrot.slane %v200, %v206
    %208 = vrot.lane.b32.xlu0 %v207, 51
    %v209 = vpop.permute.xlu0 %208
    %v210 = vrot.slane %v209, 7
    %v211 = vsel %vm100, %v210, %v209
    %s213 = scalar_lea.vmem [#allocation2], 3
    %214 = vst.msk [vmem:[%s213] ss:$4 sm:$0x7] %vm106, %v211
    %v215 = vlaneseq
    %v216 = vand.u32 %v215, 127
    %v217 = vadd.s32 %v216, 128
    %v218 = vand.u32 %v216, 15
    %v219 = vand.u32 %v217, 15
    %v220 = vlaneseq
    %v221 = vshrl.u32 %v220, 7
    %vm222 = vcmp.lt.s32.totalorder %v221, 2
    %vm223 = vcmp.ge.s32.totalorder %v218, 3
    %vm224 = vcmp.ge.s32.totalorder %v219, 3
    %vm225 = vcmp.lt.s32.totalorder %v218, 19
    %vm226 = vcmp.lt.s32.totalorder %v219, 19
    %vm227 = vmand %vm223, %vm225
    %vm228 = vmand %vm224, %vm226
    %s229 = sld [smem:[#allocation9]]
    %s230 = sld [smem:[#allocation9 + $0x31]]
    %v231 = vstv %s229
    %v232 = vstv %s230
    %v233 = vsel %vm222, %v231, %v232
    %v234 = vld [vmem:[#allocation2] sm:$0xff]
    %v236 = vcombine.high %v234, %v234
    %v238 = vmul.f32 %v233, %v234
    %v239 = vmul.f32 %v233, %v236
    %v240 = vadd.f32 %v238, 0.0
    %v241 = vadd.f32 %v239, 0.0
    %s242 = sld [smem:[#allocation9 + $0x7]]
    %s243 = sld [smem:[#allocation9 + $0x38]]
    %v244 = vstv %s242
    %v245 = vstv %s243
    %v246 = vsel %vm222, %v244, %v245
    %v247 = vld [vmem:[#allocation2] sm:$0xff]
    %v248 = vld [vmem:[#allocation2 + $0x8] sm:$0xf]
    %v251 = vcombine.high %v247, %v247
    %252 = vrot.lane.b32.xlu0 %v247, 112
    %v253 = vpop.permute.xlu0 %252
    %254 = vrot.lane.b32.xlu0 %v251, 112
    %v255 = vpop.permute.xlu0 %254
    %256 = vrot.lane.b32.xlu0 %v248, 112
    %v257 = vpop.permute.xlu0 %256
    %vm258 = vcmask 916480
    %v259 = vsel %vm258, %v253, %v255
    %v260 = vsel %vm258, %v255, %v257
    %v263 = vmul.f32 %v246, %v259
    %v264 = vmul.f32 %v246, %v260
    %v265 = vadd.f32 %v263, 0.0
    %v266 = vadd.f32 %v264, 0.0
    %s267 = sld [smem:[#allocation9 + $0xe]]
    %s268 = sld [smem:[#allocation9 + $0x3f]]
    %v269 = vstv %s267
    %v270 = vstv %s268
    %v271 = vsel %vm222, %v269, %v270
    %v272 = vld [vmem:[#allocation2] sm:$0xff]
    %v273 = vld [vmem:[#allocation2 + $0x8] sm:$0xf]
    %v276 = vcombine.high %v272, %v272
    %277 = vrot.lane.b32.xlu0 %v272, 96
    %v278 = vpop.permute.xlu0 %277
    %279 = vrot.lane.b32.xlu0 %v276, 96
    %v280 = vpop.permute.xlu0 %279
    %281 = vrot.lane.b32.xlu0 %v273, 96
    %v282 = vpop.permute.xlu0 %281
    %vm283 = vcmask 785408
    %v284 = vsel %vm283, %v278, %v280
    %v285 = vsel %vm283, %v280, %v282
    %v288 = vmul.f32 %v271, %v284
    %v289 = vmul.f32 %v271, %v285
    %v290 = vadd.f32 %v240, %v288
    %v291 = vadd.f32 %v241, %v289
    %s292 = sld [smem:[#allocation9 + $0x15]]
    %s293 = sld [smem:[#allocation9 + $0x46]]
    %v294 = vstv %s292
    %v295 = vstv %s293
    %v296 = vsel %vm222, %v294, %v295
    %v297 = vld [vmem:[#allocation2] sm:$0xff]
    %v298 = vld [vmem:[#allocation2 + $0x8] sm:$0xf]
    %v301 = vcombine.high %v297, %v297
    %302 = vrot.lane.b32.xlu0 %v297, 80
    %v303 = vpop.permute.xlu0 %302
    %304 = vrot.lane.b32.xlu0 %v301, 80
    %v305 = vpop.permute.xlu0 %304
    %306 = vrot.lane.b32.xlu0 %v298, 80
    %v307 = vpop.permute.xlu0 %306
    %vm308 = vcmask 654336
    %v309 = vsel %vm308, %v303, %v305
    %v310 = vsel %vm308, %v305, %v307
    %v313 = vmul.f32 %v296, %v309
    %v314 = vmul.f32 %v296, %v310
    %v315 = vadd.f32 %v265, %v313
    %v316 = vadd.f32 %v266, %v314
    %s317 = sld [smem:[#allocation9 + $0x1c]]
    %s318 = sld [smem:[#allocation9 + $0x4d]]
    %v319 = vstv %s317
    %v320 = vstv %s318
    %v321 = vsel %vm222, %v319, %v320
    %v322 = vld [vmem:[#allocation2] sm:$0xff]
    %v323 = vld [vmem:[#allocation2 + $0x8] sm:$0xf]
    %v326 = vcombine.high %v322, %v322
    %327 = vrot.lane.b32.xlu0 %v322, 64
    %v328 = vpop.permute.xlu0 %327
    %329 = vrot.lane.b32.xlu0 %v326, 64
    %v330 = vpop.permute.xlu0 %329
    %331 = vrot.lane.b32.xlu0 %v323, 64
    %v332 = vpop.permute.xlu0 %331
    %vm333 = vcmask 523264
    %v334 = vsel %vm333, %v328, %v330
    %v335 = vsel %vm333, %v330, %v332
    %v338 = vmul.f32 %v321, %v334
    %v339 = vmul.f32 %v321, %v335
    %v340 = vadd.f32 %v290, %v338
    %v341 = vadd.f32 %v291, %v339
    %s342 = sld [smem:[#allocation9 + $0x23]]
    %s343 = sld [smem:[#allocation9 + $0x54]]
    %v344 = vstv %s342
    %v345 = vstv %s343
    %v346 = vsel %vm222, %v344, %v345
    %v347 = vld [vmem:[#allocation2] sm:$0xff]
    %v348 = vld [vmem:[#allocation2 + $0x8] sm:$0xf]
    %v351 = vcombine.high %v347, %v347
    %352 = vrot.lane.b32.xlu0 %v347, 48
    %v353 = vpop.permute.xlu0 %352
    %354 = vrot.lane.b32.xlu0 %v351, 48
    %v355 = vpop.permute.xlu0 %354
    %356 = vrot.lane.b32.xlu0 %v348, 48
    %v357 = vpop.permute.xlu0 %356
    %vm358 = vcmask 392192
    %v359 = vsel %vm358, %v353, %v355
    %v360 = vsel %vm358, %v355, %v357
    %v363 = vmul.f32 %v346, %v359
    %v364 = vmul.f32 %v346, %v360
    %v365 = vadd.f32 %v315, %v363
    %v366 = vadd.f32 %v316, %v364
    %s367 = sld [smem:[#allocation9 + $0x2a]]
    %s368 = sld [smem:[#allocation9 + $0x5b]]
    %v369 = vstv %s367
    %v370 = vstv %s368
    %v371 = vsel %vm222, %v369, %v370
    %v372 = vld [vmem:[#allocation2] sm:$0xff]
    %v373 = vld [vmem:[#allocation2 + $0x8] sm:$0xf]
    %v376 = vcombine.high %v372, %v372
    %377 = vrot.lane.b32.xlu0 %v372, 32
    %v378 = vpop.permute.xlu0 %377
    %379 = vrot.lane.b32.xlu0 %v376, 32
    %v380 = vpop.permute.xlu0 %379
    %381 = vrot.lane.b32.xlu0 %v373, 32
    %v382 = vpop.permute.xlu0 %381
    %vm383 = vcmask 261120
    %v384 = vsel %vm383, %v378, %v380
    %v385 = vsel %vm383, %v380, %v382
    %v388 = vmul.f32 %v371, %v384
    %v389 = vmul.f32 %v371, %v385
    %v390 = vadd.f32 %v340, %v388
    %v391 = vadd.f32 %v341, %v389
    %v392 = vadd.f32 %v390, %v365
    %v393 = vadd.f32 %v391, %v366
    %v394 = vsel %vm227, 1, 0
    %v395 = vsel %vm228, 1, 0
    %vm396 = vcmp.eq.s32.totalorder %v394, 1
    %vm397 = vcmp.eq.s32.totalorder %v395, 1
    %v398 = vsel %vm396, %v392, 0.0
    %v399 = vsel %vm397, %v393, 0.0
    %v400 = vadd.f32 %v398, 0.0
    %v401 = vadd.f32 %v399, 0.0
    %vm402 = vcmp.ge.s32.totalorder %v218, 2
    %vm403 = vcmp.ge.s32.totalorder %v219, 2
    %vm404 = vcmp.lt.s32.totalorder %v218, 18
    %vm405 = vcmp.lt.s32.totalorder %v219, 18
    %vm406 = vmand %vm402, %vm404
    %vm407 = vmand %vm403, %vm405
    %s408 = sld [smem:[#allocation9 + $0x1]]
    %s409 = sld [smem:[#allocation9 + $0x32]]
    %v410 = vstv %s408
    %v411 = vstv %s409
    %v412 = vsel %vm222, %v410, %v411
    %v413 = vld [vmem:[#allocation2] sm:$0xff]
    %v414 = vld [vmem:[#allocation2 + $0x8] sm:$0xf]
    %v417 = vcombine.high %v413, %v413
    %418 = vrot.lane.b32.xlu0 %v413, 127
    %v419 = vpop.permute.xlu0 %418
    %420 = vrot.lane.b32.xlu0 %v417, 127
    %v421 = vpop.permute.xlu0 %420
    %422 = vrot.lane.b32.xlu0 %v414, 127
    %v423 = vpop.permute.xlu0 %422
    %vm424 = vcmask 1039360
    %v425 = vsel %vm424, %v419, %v421
    %v426 = vsel %vm424, %v421, %v423
    %v429 = vmul.f32 %v412, %v425
    %v430 = vmul.f32 %v412, %v426
    %v431 = vadd.f32 %v429, 0.0
    %v432 = vadd.f32 %v430, 0.0
    %s433 = sld [smem:[#allocation9 + $0x8]]
    %s434 = sld [smem:[#allocation9 + $0x39]]
    %v435 = vstv %s433
    %v436 = vstv %s434
    %v437 = vsel %vm222, %v435, %v436
    %v438 = vld [vmem:[#allocation2] sm:$0xff]
    %v439 = vld [vmem:[#allocation2 + $0x8] sm:$0xf]
    %v442 = vcombine.high %v438, %v438
    %443 = vrot.lane.b32.xlu0 %v438, 111
    %v444 = vpop.permute.xlu0 %443
    %445 = vrot.lane.b32.xlu0 %v442, 111
    %v446 = vpop.permute.xlu0 %445
    %447 = vrot.lane.b32.xlu0 %v439, 111
    %v448 = vpop.permute.xlu0 %447
    %vm449 = vcmask 908288
    %v450 = vsel %vm449, %v444, %v446
    %v451 = vsel %vm449, %v446, %v448
    %v454 = vmul.f32 %v437, %v450
    %v455 = vmul.f32 %v437, %v451
    %v456 = vadd.f32 %v454, 0.0
    %v457 = vadd.f32 %v455, 0.0
    %s458 = sld [smem:[#allocation9 + $0xf]]
    %s459 = sld [smem:[#allocation9 + $0x40]]
    %v460 = vstv %s458
    %v461 = vstv %s459
    %v462 = vsel %vm222, %v460, %v461
    %v463 = vld [vmem:[#allocation2] sm:$0xff]
    %v464 = vld [vmem:[#allocation2 + $0x8] sm:$0xf]
    %v467 = vcombine.high %v463, %v463
    %468 = vrot.lane.b32.xlu0 %v463, 95
    %v469 = vpop.permute.xlu0 %468
    %470 = vrot.lane.b32.xlu0 %v467, 95
    %v471 = vpop.permute.xlu0 %470
    %472 = vrot.lane.b32.xlu0 %v464, 95
    %v473 = vpop.permute.xlu0 %472
    %vm474 = vcmask 777216
    %v475 = vsel %vm474, %v469, %v471
    %v476 = vsel %vm474, %v471, %v473
    %v479 = vmul.f32 %v462, %v475
    %v480 = vmul.f32 %v462, %v476
    %v481 = vadd.f32 %v431, %v479
    %v482 = vadd.f32 %v432, %v480
    %s483 = sld [smem:[#allocation9 + $0x16]]
    %s484 = sld [smem:[#allocation9 + $0x47]]
    %v485 = vstv %s483
    %v486 = vstv %s484
    %v487 = vsel %vm222, %v485, %v486
    %v488 = vld [vmem:[#allocation2] sm:$0xff]
    %v489 = vld [vmem:[#allocation2 + $0x8] sm:$0xf]
    %v492 = vcombine.high %v488, %v488
    %493 = vrot.lane.b32.xlu0 %v488, 79
    %v494 = vpop.permute.xlu0 %493
    %495 = vrot.lane.b32.xlu0 %v492, 79
    %v496 = vpop.permute.xlu0 %495
    %497 = vrot.lane.b32.xlu0 %v489, 79
    %v498 = vpop.permute.xlu0 %497
    %vm499 = vcmask 646144
    %v500 = vsel %vm499, %v494, %v496
    %v501 = vsel %vm499, %v496, %v498
    %v504 = vmul.f32 %v487, %v500
    %v505 = vmul.f32 %v487, %v501
    %v506 = vadd.f32 %v456, %v504
    %v507 = vadd.f32 %v457, %v505
    %s508 = sld [smem:[#allocation9 + $0x1d]]
    %s509 = sld [smem:[#allocation9 + $0x4e]]
    %v510 = vstv %s508
    %v511 = vstv %s509
    %v512 = vsel %vm222, %v510, %v511
    %v513 = vld [vmem:[#allocation2] sm:$0xff]
    %v514 = vld [vmem:[#allocation2 + $0x8] sm:$0xf]
    %v517 = vcombine.high %v513, %v513
    %518 = vrot.lane.b32.xlu0 %v513, 63
    %v519 = vpop.permute.xlu0 %518
    %520 = vrot.lane.b32.xlu0 %v517, 63
    %v521 = vpop.permute.xlu0 %520
    %522 = vrot.lane.b32.xlu0 %v514, 63
    %v523 = vpop.permute.xlu0 %522
    %vm524 = vcmask 515072
    %v525 = vsel %vm524, %v519, %v521
    %v526 = vsel %vm524, %v521, %v523
    %v529 = vmul.f32 %v512, %v525
    %v530 = vmul.f32 %v512, %v526
    %v531 = vadd.f32 %v481, %v529
    %v532 = vadd.f32 %v482, %v530
    %s533 = sld [smem:[#allocation9 + $0x24]]
    %s534 = sld [smem:[#allocation9 + $0x55]]
    %v535 = vstv %s533
    %v536 = vstv %s534
    %v537 = vsel %vm222, %v535, %v536
    %v538 = vld [vmem:[#allocation2] sm:$0xff]
    %v539 = vld [vmem:[#allocation2 + $0x8] sm:$0xf]
    %v542 = vcombine.high %v538, %v538
    %543 = vrot.lane.b32.xlu0 %v538, 47
    %v544 = vpop.permute.xlu0 %543
    %545 = vrot.lane.b32.xlu0 %v542, 47
    %v546 = vpop.permute.xlu0 %545
    %547 = vrot.lane.b32.xlu0 %v539, 47
    %v548 = vpop.permute.xlu0 %547
    %vm549 = vcmask 384000
    %v550 = vsel %vm549, %v544, %v546
    %v551 = vsel %vm549, %v546, %v548
    %v554 = vmul.f32 %v537, %v550
    %v555 = vmul.f32 %v537, %v551
    %v556 = vadd.f32 %v506, %v554
    %v557 = vadd.f32 %v507, %v555
    %s558 = sld [smem:[#allocation9 + $0x2b]]
    %s559 = sld [smem:[#allocation9 + $0x5c]]
    %v560 = vstv %s558
    %v561 = vstv %s559
    %v562 = vsel %vm222, %v560, %v561
    %v563 = vld [vmem:[#allocation2] sm:$0xff]
    %v564 = vld [vmem:[#allocation2 + $0x8] sm:$0xf]
    %v567 = vcombine.high %v563, %v563
    %568 = vrot.lane.b32.xlu0 %v563, 31
    %v569 = vpop.permute.xlu0 %568
    %570 = vrot.lane.b32.xlu0 %v567, 31
    %v571 = vpop.permute.xlu0 %570
    %572 = vrot.lane.b32.xlu0 %v564, 31
    %v573 = vpop.permute.xlu0 %572
    %vm574 = vcmask 252928
    %v575 = vsel %vm574, %v569, %v571
    %v576 = vsel %vm574, %v571, %v573
    %v579 = vmul.f32 %v562, %v575
    %v580 = vmul.f32 %v562, %v576
    %v581 = vadd.f32 %v531, %v579
    %v582 = vadd.f32 %v532, %v580
    %v583 = vadd.f32 %v581, %v556
    %v584 = vadd.f32 %v582, %v557
    %v585 = vsel %vm406, 1, 0
    %v586 = vsel %vm407, 1, 0
    %vm587 = vcmp.eq.s32.totalorder %v585, 1
    %vm588 = vcmp.eq.s32.totalorder %v586, 1
    %v589 = vsel %vm587, %v583, 0.0
    %v590 = vsel %vm588, %v584, 0.0
    %v591 = vadd.f32 %v589, 0.0
    %v592 = vadd.f32 %v590, 0.0
    %vm593 = vcmp.ge.s32.totalorder %v218, 1
    %vm594 = vcmp.ge.s32.totalorder %v219, 1
    %vm595 = vcmp.lt.s32.totalorder %v218, 17
    %vm596 = vcmp.lt.s32.totalorder %v219, 17
    %vm597 = vmand %vm593, %vm595
    %vm598 = vmand %vm594, %vm596
    %s599 = sld [smem:[#allocation9 + $0x2]]
    %s600 = sld [smem:[#allocation9 + $0x33]]
    %v601 = vstv %s599
    %v602 = vstv %s600
    %v603 = vsel %vm222, %v601, %v602
    %v604 = vld [vmem:[#allocation2] sm:$0xff]
    %v605 = vld [vmem:[#allocation2 + $0x8] sm:$0xf]
    %v608 = vcombine.high %v604, %v604
    %609 = vrot.lane.b32.xlu0 %v604, 126
    %v610 = vpop.permute.xlu0 %609
    %611 = vrot.lane.b32.xlu0 %v608, 126
    %v612 = vpop.permute.xlu0 %611
    %613 = vrot.lane.b32.xlu0 %v605, 126
    %v614 = vpop.permute.xlu0 %613
    %vm615 = vcmask 1031168
    %v616 = vsel %vm615, %v610, %v612
    %v617 = vsel %vm615, %v612, %v614
    %v620 = vmul.f32 %v603, %v616
    %v621 = vmul.f32 %v603, %v617
    %v622 = vadd.f32 %v620, 0.0
    %v623 = vadd.f32 %v621, 0.0
    %s624 = sld [smem:[#allocation9 + $0x9]]
    %s625 = sld [smem:[#allocation9 + $0x3a]]
    %v626 = vstv %s624
    %v627 = vstv %s625
    %v628 = vsel %vm222, %v626, %v627
    %v629 = vld [vmem:[#allocation2] sm:$0xff]
    %v630 = vld [vmem:[#allocation2 + $0x8] sm:$0xf]
    %v633 = vcombine.high %v629, %v629
    %634 = vrot.lane.b32.xlu0 %v629, 110
    %v635 = vpop.permute.xlu0 %634
    %636 = vrot.lane.b32.xlu0 %v633, 110
    %v637 = vpop.permute.xlu0 %636
    %638 = vrot.lane.b32.xlu0 %v630, 110
    %v639 = vpop.permute.xlu0 %638
    %vm640 = vcmask 900096
    %v641 = vsel %vm640, %v635, %v637
    %v642 = vsel %vm640, %v637, %v639
    %v645 = vmul.f32 %v628, %v641
    %v646 = vmul.f32 %v628, %v642
    %v647 = vadd.f32 %v645, 0.0
    %v648 = vadd.f32 %v646, 0.0
    %s649 = sld [smem:[#allocation9 + $0x10]]
    %s650 = sld [smem:[#allocation9 + $0x41]]
    %v651 = vstv %s649
    %v652 = vstv %s650
    %v653 = vsel %vm222, %v651, %v652
    %v654 = vld [vmem:[#allocation2] sm:$0xff]
    %v655 = vld [vmem:[#allocation2 + $0x8] sm:$0xf]
    %v658 = vcombine.high %v654, %v654
    %659 = vrot.lane.b32.xlu0 %v654, 94
    %v660 = vpop.permute.xlu0 %659
    %661 = vrot.lane.b32.xlu0 %v658, 94
    %v662 = vpop.permute.xlu0 %661
    %663 = vrot.lane.b32.xlu0 %v655, 94
    %v664 = vpop.permute.xlu0 %663
    %vm665 = vcmask 769024
    %v666 = vsel %vm665, %v660, %v662
    %v667 = vsel %vm665, %v662, %v664
    %v670 = vmul.f32 %v653, %v666
    %v671 = vmul.f32 %v653, %v667
    %v672 = vadd.f32 %v622, %v670
    %v673 = vadd.f32 %v623, %v671
    %s674 = sld [smem:[#allocation9 + $0x17]]
    %s675 = sld [smem:[#allocation9 + $0x48]]
    %v676 = vstv %s674
    %v677 = vstv %s675
    %v678 = vsel %vm222, %v676, %v677
    %v679 = vld [vmem:[#allocation2] sm:$0xff]
    %v680 = vld [vmem:[#allocation2 + $0x8] sm:$0xf]
    %v683 = vcombine.high %v679, %v679
    %684 = vrot.lane.b32.xlu0 %v679, 78
    %v685 = vpop.permute.xlu0 %684
    %686 = vrot.lane.b32.xlu0 %v683, 78
    %v687 = vpop.permute.xlu0 %686
    %688 = vrot.lane.b32.xlu0 %v680, 78
    %v689 = vpop.permute.xlu0 %688
    %vm690 = vcmask 637952
    %v691 = vsel %vm690, %v685, %v687
    %v692 = vsel %vm690, %v687, %v689
    %v695 = vmul.f32 %v678, %v691
    %v696 = vmul.f32 %v678, %v692
    %v697 = vadd.f32 %v647, %v695
    %v698 = vadd.f32 %v648, %v696
    %s699 = sld [smem:[#allocation9 + $0x1e]]
    %s700 = sld [smem:[#allocation9 + $0x4f]]
    %v701 = vstv %s699
    %v702 = vstv %s700
    %v703 = vsel %vm222, %v701, %v702
    %v704 = vld [vmem:[#allocation2] sm:$0xff]
    %v705 = vld [vmem:[#allocation2 + $0x8] sm:$0xf]
    %v708 = vcombine.high %v704, %v704
    %709 = vrot.lane.b32.xlu0 %v704, 62
    %v710 = vpop.permute.xlu0 %709
    %711 = vrot.lane.b32.xlu0 %v708, 62
    %v712 = vpop.permute.xlu0 %711
    %713 = vrot.lane.b32.xlu0 %v705, 62
    %v714 = vpop.permute.xlu0 %713
    %vm715 = vcmask 506880
    %v716 = vsel %vm715, %v710, %v712
    %v717 = vsel %vm715, %v712, %v714
    %v720 = vmul.f32 %v703, %v716
    %v721 = vmul.f32 %v703, %v717
    %v722 = vadd.f32 %v672, %v720
    %v723 = vadd.f32 %v673, %v721
    %s724 = sld [smem:[#allocation9 + $0x25]]
    %s725 = sld [smem:[#allocation9 + $0x56]]
    %v726 = vstv %s724
    %v727 = vstv %s725
    %v728 = vsel %vm222, %v726, %v727
    %v729 = vld [vmem:[#allocation2] sm:$0xff]
    %v730 = vld [vmem:[#allocation2 + $0x8] sm:$0xf]
    %v733 = vcombine.high %v729, %v729
    %734 = vrot.lane.b32.xlu0 %v729, 46
    %v735 = vpop.permute.xlu0 %734
    %736 = vrot.lane.b32.xlu0 %v733, 46
    %v737 = vpop.permute.xlu0 %736
    %738 = vrot.lane.b32.xlu0 %v730, 46
    %v739 = vpop.permute.xlu0 %738
    %vm740 = vcmask 375808
    %v741 = vsel %vm740, %v735, %v737
    %v742 = vsel %vm740, %v737, %v739
    %v745 = vmul.f32 %v728, %v741
    %v746 = vmul.f32 %v728, %v742
    %v747 = vadd.f32 %v697, %v745
    %v748 = vadd.f32 %v698, %v746
    %s749 = sld [smem:[#allocation9 + $0x2c]]
    %s750 = sld [smem:[#allocation9 + $0x5d]]
    %v751 = vstv %s749
    %v752 = vstv %s750
    %v753 = vsel %vm222, %v751, %v752
    %v754 = vld [vmem:[#allocation2] sm:$0xff]
    %v755 = vld [vmem:[#allocation2 + $0x8] sm:$0xf]
    %v758 = vcombine.high %v754, %v754
    %759 = vrot.lane.b32.xlu0 %v754, 30
    %v760 = vpop.permute.xlu0 %759
    %761 = vrot.lane.b32.xlu0 %v758, 30
    %v762 = vpop.permute.xlu0 %761
    %763 = vrot.lane.b32.xlu0 %v755, 30
    %v764 = vpop.permute.xlu0 %763
    %vm765 = vcmask 244736
    %v766 = vsel %vm765, %v760, %v762
    %v767 = vsel %vm765, %v762, %v764
    %v770 = vmul.f32 %v753, %v766
    %v771 = vmul.f32 %v753, %v767
    %v772 = vadd.f32 %v722, %v770
    %v773 = vadd.f32 %v723, %v771
    %v774 = vadd.f32 %v772, %v747
    %v775 = vadd.f32 %v773, %v748
    %v776 = vsel %vm597, 1, 0
    %v777 = vsel %vm598, 1, 0
    %vm778 = vcmp.eq.s32.totalorder %v776, 1
    %vm779 = vcmp.eq.s32.totalorder %v777, 1
    %v780 = vsel %vm778, %v774, 0.0
    %v781 = vsel %vm779, %v775, 0.0
    %v782 = vadd.f32 %v400, %v780
    %v783 = vadd.f32 %v401, %v781
    %vm784 = vcmp.ge.s32.totalorder %v218, 0
    %vm785 = vcmp.ge.s32.totalorder %v219, 0
    %vm786 = vcmp.lt.s32.totalorder %v218, 16
    %vm787 = vcmp.lt.s32.totalorder %v219, 16
    %vm788 = vmand %vm784, %vm786
    %vm789 = vmand %vm785, %vm787
    %s790 = sld [smem:[#allocation9 + $0x3]]
    %s791 = sld [smem:[#allocation9 + $0x34]]
    %v792 = vstv %s790
    %v793 = vstv %s791
    %v794 = vsel %vm222, %v792, %v793
    %v795 = vld [vmem:[#allocation2] sm:$0xff]
    %v796 = vld [vmem:[#allocation2 + $0x8] sm:$0xf]
    %v799 = vcombine.high %v795, %v795
    %800 = vrot.lane.b32.xlu0 %v795, 125
    %v801 = vpop.permute.xlu0 %800
    %802 = vrot.lane.b32.xlu0 %v799, 125
    %v803 = vpop.permute.xlu0 %802
    %804 = vrot.lane.b32.xlu0 %v796, 125
    %v805 = vpop.permute.xlu0 %804
    %vm806 = vcmask 1022976
    %v807 = vsel %vm806, %v801, %v803
    %v808 = vsel %vm806, %v803, %v805
    %v811 = vmul.f32 %v794, %v807
    %v812 = vmul.f32 %v794, %v808
    %v813 = vadd.f32 %v811, 0.0
    %v814 = vadd.f32 %v812, 0.0
    %s815 = sld [smem:[#allocation9 + $0xa]]
    %s816 = sld [smem:[#allocation9 + $0x3b]]
    %v817 = vstv %s815
    %v818 = vstv %s816
    %v819 = vsel %vm222, %v817, %v818
    %v820 = vld [vmem:[#allocation2] sm:$0xff]
    %v821 = vld [vmem:[#allocation2 + $0x8] sm:$0xf]
    %v824 = vcombine.high %v820, %v820
    %825 = vrot.lane.b32.xlu0 %v820, 109
    %v826 = vpop.permute.xlu0 %825
    %827 = vrot.lane.b32.xlu0 %v824, 109
    %v828 = vpop.permute.xlu0 %827
    %829 = vrot.lane.b32.xlu0 %v821, 109
    %v830 = vpop.permute.xlu0 %829
    %vm831 = vcmask 891904
    %v832 = vsel %vm831, %v826, %v828
    %v833 = vsel %vm831, %v828, %v830
    %v836 = vmul.f32 %v819, %v832
    %v837 = vmul.f32 %v819, %v833
    %v838 = vadd.f32 %v836, 0.0
    %v839 = vadd.f32 %v837, 0.0
    %s840 = sld [smem:[#allocation9 + $0x11]]
    %s841 = sld [smem:[#allocation9 + $0x42]]
    %v842 = vstv %s840
    %v843 = vstv %s841
    %v844 = vsel %vm222, %v842, %v843
    %v845 = vld [vmem:[#allocation2] sm:$0xff]
    %v846 = vld [vmem:[#allocation2 + $0x8] sm:$0xf]
    %v849 = vcombine.high %v845, %v845
    %850 = vrot.lane.b32.xlu0 %v845, 93
    %v851 = vpop.permute.xlu0 %850
    %852 = vrot.lane.b32.xlu0 %v849, 93
    %v853 = vpop.permute.xlu0 %852
    %854 = vrot.lane.b32.xlu0 %v846, 93
    %v855 = vpop.permute.xlu0 %854
    %vm856 = vcmask 760832
    %v857 = vsel %vm856, %v851, %v853
    %v858 = vsel %vm856, %v853, %v855
    %v861 = vmul.f32 %v844, %v857
    %v862 = vmul.f32 %v844, %v858
    %v863 = vadd.f32 %v813, %v861
    %v864 = vadd.f32 %v814, %v862
    %s865 = sld [smem:[#allocation9 + $0x18]]
    %s866 = sld [smem:[#allocation9 + $0x49]]
    %v867 = vstv %s865
    %v868 = vstv %s866
    %v869 = vsel %vm222, %v867, %v868
    %v870 = vld [vmem:[#allocation2] sm:$0xff]
    %v871 = vld [vmem:[#allocation2 + $0x8] sm:$0xf]
    %v874 = vcombine.high %v870, %v870
    %875 = vrot.lane.b32.xlu0 %v870, 77
    %v876 = vpop.permute.xlu0 %875
    %877 = vrot.lane.b32.xlu0 %v874, 77
    %v878 = vpop.permute.xlu0 %877
    %879 = vrot.lane.b32.xlu0 %v871, 77
    %v880 = vpop.permute.xlu0 %879
    %vm881 = vcmask 629760
    %v882 = vsel %vm881, %v876, %v878
    %v883 = vsel %vm881, %v878, %v880
    %v886 = vmul.f32 %v869, %v882
    %v887 = vmul.f32 %v869, %v883
    %v888 = vadd.f32 %v838, %v886
    %v889 = vadd.f32 %v839, %v887
    %s890 = sld [smem:[#allocation9 + $0x1f]]
    %s891 = sld [smem:[#allocation9 + $0x50]]
    %v892 = vstv %s890
    %v893 = vstv %s891
    %v894 = vsel %vm222, %v892, %v893
    %v895 = vld [vmem:[#allocation2] sm:$0xff]
    %v896 = vld [vmem:[#allocation2 + $0x8] sm:$0xf]
    %v899 = vcombine.high %v895, %v895
    %900 = vrot.lane.b32.xlu0 %v895, 61
    %v901 = vpop.permute.xlu0 %900
    %902 = vrot.lane.b32.xlu0 %v899, 61
    %v903 = vpop.permute.xlu0 %902
    %904 = vrot.lane.b32.xlu0 %v896, 61
    %v905 = vpop.permute.xlu0 %904
    %vm906 = vcmask 498688
    %v907 = vsel %vm906, %v901, %v903
    %v908 = vsel %vm906, %v903, %v905
    %v911 = vmul.f32 %v894, %v907
    %v912 = vmul.f32 %v894, %v908
    %v913 = vadd.f32 %v863, %v911
    %v914 = vadd.f32 %v864, %v912
    %s915 = sld [smem:[#allocation9 + $0x26]]
    %s916 = sld [smem:[#allocation9 + $0x57]]
    %v917 = vstv %s915
    %v918 = vstv %s916
    %v919 = vsel %vm222, %v917, %v918
    %v920 = vld [vmem:[#allocation2] sm:$0xff]
    %v921 = vld [vmem:[#allocation2 + $0x8] sm:$0xf]
    %v924 = vcombine.high %v920, %v920
    %925 = vrot.lane.b32.xlu0 %v920, 45
    %v926 = vpop.permute.xlu0 %925
    %927 = vrot.lane.b32.xlu0 %v924, 45
    %v928 = vpop.permute.xlu0 %927
    %929 = vrot.lane.b32.xlu0 %v921, 45
    %v930 = vpop.permute.xlu0 %929
    %vm931 = vcmask 367616
    %v932 = vsel %vm931, %v926, %v928
    %v933 = vsel %vm931, %v928, %v930
    %v936 = vmul.f32 %v919, %v932
    %v937 = vmul.f32 %v919, %v933
    %v938 = vadd.f32 %v888, %v936
    %v939 = vadd.f32 %v889, %v937
    %s940 = sld [smem:[#allocation9 + $0x2d]]
    %s941 = sld [smem:[#allocation9 + $0x5e]]
    %v942 = vstv %s940
    %v943 = vstv %s941
    %v944 = vsel %vm222, %v942, %v943
    %v945 = vld [vmem:[#allocation2] sm:$0xff]
    %v946 = vld [vmem:[#allocation2 + $0x8] sm:$0xf]
    %v949 = vcombine.high %v945, %v945
    %950 = vrot.lane.b32.xlu0 %v945, 29
    %v951 = vpop.permute.xlu0 %950
    %952 = vrot.lane.b32.xlu0 %v949, 29
    %v953 = vpop.permute.xlu0 %952
    %954 = vrot.lane.b32.xlu0 %v946, 29
    %v955 = vpop.permute.xlu0 %954
    %vm956 = vcmask 236544
    %v957 = vsel %vm956, %v951, %v953
    %v958 = vsel %vm956, %v953, %v955
    %v961 = vmul.f32 %v944, %v957
    %v962 = vmul.f32 %v944, %v958
    %v963 = vadd.f32 %v913, %v961
    %v964 = vadd.f32 %v914, %v962
    %v965 = vadd.f32 %v963, %v938
    %v966 = vadd.f32 %v964, %v939
    %v967 = vsel %vm788, 1, 0
    %v968 = vsel %vm789, 1, 0
    %vm969 = vcmp.eq.s32.totalorder %v967, 1
    %vm970 = vcmp.eq.s32.totalorder %v968, 1
    %v971 = vsel %vm969, %v965, 0.0
    %v972 = vsel %vm970, %v966, 0.0
    %v973 = vadd.f32 %v591, %v971
    %v974 = vadd.f32 %v592, %v972
    %vm975 = vcmp.ge.s32.totalorder %v218, 4294967295
    %vm976 = vcmp.ge.s32.totalorder %v219, 4294967295
    %vm977 = vcmp.lt.s32.totalorder %v218, 15
    %vm978 = vcmp.lt.s32.totalorder %v219, 15
    %vm979 = vmand %vm975, %vm977
    %vm980 = vmand %vm976, %vm978
    %s981 = sld [smem:[#allocation9 + $0x4]]
    %s982 = sld [smem:[#allocation9 + $0x35]]
    %v983 = vstv %s981
    %v984 = vstv %s982
    %v985 = vsel %vm222, %v983, %v984
    %v986 = vld [vmem:[#allocation2] sm:$0xff]
    %v987 = vld [vmem:[#allocation2 + $0x8] sm:$0xf]
    %v990 = vcombine.high %v986, %v986
    %991 = vrot.lane.b32.xlu0 %v986, 124
    %v992 = vpop.permute.xlu0 %991
    %993 = vrot.lane.b32.xlu0 %v990, 124
    %v994 = vpop.permute.xlu0 %993
    %995 = vrot.lane.b32.xlu0 %v987, 124
    %v996 = vpop.permute.xlu0 %995
    %vm997 = vcmask 1014784
    %v998 = vsel %vm997, %v992, %v994
    %v999 = vsel %vm997, %v994, %v996
    %v1002 = vmul.f32 %v985, %v998
    %v1003 = vmul.f32 %v985, %v999
    %v1004 = vadd.f32 %v1002, 0.0
    %v1005 = vadd.f32 %v1003, 0.0
    %s1006 = sld [smem:[#allocation9 + $0xb]]
    %s1007 = sld [smem:[#allocation9 + $0x3c]]
    %v1008 = vstv %s1006
    %v1009 = vstv %s1007
    %v1010 = vsel %vm222, %v1008, %v1009
    %v1011 = vld [vmem:[#allocation2] sm:$0xff]
    %v1012 = vld [vmem:[#allocation2 + $0x8] sm:$0xf]
    %v1015 = vcombine.high %v1011, %v1011
    %1016 = vrot.lane.b32.xlu0 %v1011, 108
    %v1017 = vpop.permute.xlu0 %1016
    %1018 = vrot.lane.b32.xlu0 %v1015, 108
    %v1019 = vpop.permute.xlu0 %1018
    %1020 = vrot.lane.b32.xlu0 %v1012, 108
    %v1021 = vpop.permute.xlu0 %1020
    %vm1022 = vcmask 883712
    %v1023 = vsel %vm1022, %v1017, %v1019
    %v1024 = vsel %vm1022, %v1019, %v1021
    %v1027 = vmul.f32 %v1010, %v1023
    %v1028 = vmul.f32 %v1010, %v1024
    %v1029 = vadd.f32 %v1027, 0.0
    %v1030 = vadd.f32 %v1028, 0.0
    %s1031 = sld [smem:[#allocation9 + $0x12]]
    %s1032 = sld [smem:[#allocation9 + $0x43]]
    %v1033 = vstv %s1031
    %v1034 = vstv %s1032
    %v1035 = vsel %vm222, %v1033, %v1034
    %v1036 = vld [vmem:[#allocation2] sm:$0xff]
    %v1037 = vld [vmem:[#allocation2 + $0x8] sm:$0xf]
    %v1040 = vcombine.high %v1036, %v1036
    %1041 = vrot.lane.b32.xlu0 %v1036, 92
    %v1042 = vpop.permute.xlu0 %1041
    %1043 = vrot.lane.b32.xlu0 %v1040, 92
    %v1044 = vpop.permute.xlu0 %1043
    %1045 = vrot.lane.b32.xlu0 %v1037, 92
    %v1046 = vpop.permute.xlu0 %1045
    %vm1047 = vcmask 752640
    %v1048 = vsel %vm1047, %v1042, %v1044
    %v1049 = vsel %vm1047, %v1044, %v1046
    %v1052 = vmul.f32 %v1035, %v1048
    %v1053 = vmul.f32 %v1035, %v1049
    %v1054 = vadd.f32 %v1004, %v1052
    %v1055 = vadd.f32 %v1005, %v1053
    %s1056 = sld [smem:[#allocation9 + $0x19]]
    %s1057 = sld [smem:[#allocation9 + $0x4a]]
    %v1058 = vstv %s1056
    %v1059 = vstv %s1057
    %v1060 = vsel %vm222, %v1058, %v1059
    %v1061 = vld [vmem:[#allocation2] sm:$0xff]
    %v1062 = vld [vmem:[#allocation2 + $0x8] sm:$0xf]
    %v1065 = vcombine.high %v1061, %v1061
    %1066 = vrot.lane.b32.xlu0 %v1061, 76
    %v1067 = vpop.permute.xlu0 %1066
    %1068 = vrot.lane.b32.xlu0 %v1065, 76
    %v1069 = vpop.permute.xlu0 %1068
    %1070 = vrot.lane.b32.xlu0 %v1062, 76
    %v1071 = vpop.permute.xlu0 %1070
    %vm1072 = vcmask 621568
    %v1073 = vsel %vm1072, %v1067, %v1069
    %v1074 = vsel %vm1072, %v1069, %v1071
    %v1077 = vmul.f32 %v1060, %v1073
    %v1078 = vmul.f32 %v1060, %v1074
    %v1079 = vadd.f32 %v1029, %v1077
    %v1080 = vadd.f32 %v1030, %v1078
    %s1081 = sld [smem:[#allocation9 + $0x20]]
    %s1082 = sld [smem:[#allocation9 + $0x51]]
    %v1083 = vstv %s1081
    %v1084 = vstv %s1082
    %v1085 = vsel %vm222, %v1083, %v1084
    %v1086 = vld [vmem:[#allocation2] sm:$0xff]
    %v1087 = vld [vmem:[#allocation2 + $0x8] sm:$0xf]
    %v1090 = vcombine.high %v1086, %v1086
    %1091 = vrot.lane.b32.xlu0 %v1086, 60
    %v1092 = vpop.permute.xlu0 %1091
    %1093 = vrot.lane.b32.xlu0 %v1090, 60
    %v1094 = vpop.permute.xlu0 %1093
    %1095 = vrot.lane.b32.xlu0 %v1087, 60
    %v1096 = vpop.permute.xlu0 %1095
    %vm1097 = vcmask 490496
    %v1098 = vsel %vm1097, %v1092, %v1094
    %v1099 = vsel %vm1097, %v1094, %v1096
    %v1102 = vmul.f32 %v1085, %v1098
    %v1103 = vmul.f32 %v1085, %v1099
    %v1104 = vadd.f32 %v1054, %v1102
    %v1105 = vadd.f32 %v1055, %v1103
    %s1106 = sld [smem:[#allocation9 + $0x27]]
    %s1107 = sld [smem:[#allocation9 + $0x58]]
    %v1108 = vstv %s1106
    %v1109 = vstv %s1107
    %v1110 = vsel %vm222, %v1108, %v1109
    %v1111 = vld [vmem:[#allocation2] sm:$0xff]
    %v1112 = vld [vmem:[#allocation2 + $0x8] sm:$0xf]
    %v1115 = vcombine.high %v1111, %v1111
    %1116 = vrot.lane.b32.xlu0 %v1111, 44
    %v1117 = vpop.permute.xlu0 %1116
    %1118 = vrot.lane.b32.xlu0 %v1115, 44
    %v1119 = vpop.permute.xlu0 %1118
    %1120 = vrot.lane.b32.xlu0 %v1112, 44
    %v1121 = vpop.permute.xlu0 %1120
    %vm1122 = vcmask 359424
    %v1123 = vsel %vm1122, %v1117, %v1119
    %v1124 = vsel %vm1122, %v1119, %v1121
    %v1127 = vmul.f32 %v1110, %v1123
    %v1128 = vmul.f32 %v1110, %v1124
    %v1129 = vadd.f32 %v1079, %v1127
    %v1130 = vadd.f32 %v1080, %v1128
    %s1131 = sld [smem:[#allocation9 + $0x2e]]
    %s1132 = sld [smem:[#allocation9 + $0x5f]]
    %v1133 = vstv %s1131
    %v1134 = vstv %s1132
    %v1135 = vsel %vm222, %v1133, %v1134
    %v1136 = vld [vmem:[#allocation2] sm:$0xff]
    %v1137 = vld [vmem:[#allocation2 + $0x8] sm:$0xf]
    %v1140 = vcombine.high %v1136, %v1136
    %1141 = vrot.lane.b32.xlu0 %v1136, 28
    %v1142 = vpop.permute.xlu0 %1141
    %1143 = vrot.lane.b32.xlu0 %v1140, 28
    %v1144 = vpop.permute.xlu0 %1143
    %1145 = vrot.lane.b32.xlu0 %v1137, 28
    %v1146 = vpop.permute.xlu0 %1145
    %vm1147 = vcmask 228352
    %v1148 = vsel %vm1147, %v1142, %v1144
    %v1149 = vsel %vm1147, %v1144, %v1146
    %v1152 = vmul.f32 %v1135, %v1148
    %v1153 = vmul.f32 %v1135, %v1149
    %v1154 = vadd.f32 %v1104, %v1152
    %v1155 = vadd.f32 %v1105, %v1153
    %v1156 = vadd.f32 %v1154, %v1129
    %v1157 = vadd.f32 %v1155, %v1130
    %v1158 = vsel %vm979, 1, 0
    %v1159 = vsel %vm980, 1, 0
    %vm1160 = vcmp.eq.s32.totalorder %v1158, 1
    %vm1161 = vcmp.eq.s32.totalorder %v1159, 1
    %v1162 = vsel %vm1160, %v1156, 0.0
    %v1163 = vsel %vm1161, %v1157, 0.0
    %v1164 = vadd.f32 %v782, %v1162
    %v1165 = vadd.f32 %v783, %v1163
    %vm1166 = vcmp.ge.s32.totalorder %v218, 4294967294
    %vm1167 = vcmp.ge.s32.totalorder %v219, 4294967294
    %vm1168 = vcmp.lt.s32.totalorder %v218, 14
    %vm1169 = vcmp.lt.s32.totalorder %v219, 14
    %vm1170 = vmand %vm1166, %vm1168
    %vm1171 = vmand %vm1167, %vm1169
    %s1172 = sld [smem:[#allocation9 + $0x5]]
    %s1173 = sld [smem:[#allocation9 + $0x36]]
    %v1174 = vstv %s1172
    %v1175 = vstv %s1173
    %v1176 = vsel %vm222, %v1174, %v1175
    %v1177 = vld [vmem:[#allocation2] sm:$0xff]
    %v1178 = vld [vmem:[#allocation2 + $0x8] sm:$0xf]
    %v1181 = vcombine.high %v1177, %v1177
    %1182 = vrot.lane.b32.xlu0 %v1177, 123
    %v1183 = vpop.permute.xlu0 %1182
    %1184 = vrot.lane.b32.xlu0 %v1181, 123
    %v1185 = vpop.permute.xlu0 %1184
    %1186 = vrot.lane.b32.xlu0 %v1178, 123
    %v1187 = vpop.permute.xlu0 %1186
    %vm1188 = vcmask 1006592
    %v1189 = vsel %vm1188, %v1183, %v1185
    %v1190 = vsel %vm1188, %v1185, %v1187
    %v1193 = vmul.f32 %v1176, %v1189
    %v1194 = vmul.f32 %v1176, %v1190
    %v1195 = vadd.f32 %v1193, 0.0
    %v1196 = vadd.f32 %v1194, 0.0
    %s1197 = sld [smem:[#allocation9 + $0xc]]
    %s1198 = sld [smem:[#allocation9 + $0x3d]]
    %v1199 = vstv %s1197
    %v1200 = vstv %s1198
    %v1201 = vsel %vm222, %v1199, %v1200
    %v1202 = vld [vmem:[#allocation2] sm:$0xff]
    %v1203 = vld [vmem:[#allocation2 + $0x8] sm:$0xf]
    %v1206 = vcombine.high %v1202, %v1202
    %1207 = vrot.lane.b32.xlu0 %v1202, 107
    %v1208 = vpop.permute.xlu0 %1207
    %1209 = vrot.lane.b32.xlu0 %v1206, 107
    %v1210 = vpop.permute.xlu0 %1209
    %1211 = vrot.lane.b32.xlu0 %v1203, 107
    %v1212 = vpop.permute.xlu0 %1211
    %vm1213 = vcmask 875520
    %v1214 = vsel %vm1213, %v1208, %v1210
    %v1215 = vsel %vm1213, %v1210, %v1212
    %v1218 = vmul.f32 %v1201, %v1214
    %v1219 = vmul.f32 %v1201, %v1215
    %v1220 = vadd.f32 %v1218, 0.0
    %v1221 = vadd.f32 %v1219, 0.0
    %s1222 = sld [smem:[#allocation9 + $0x13]]
    %s1223 = sld [smem:[#allocation9 + $0x44]]
    %v1224 = vstv %s1222
    %v1225 = vstv %s1223
    %v1226 = vsel %vm222, %v1224, %v1225
    %v1227 = vld [vmem:[#allocation2] sm:$0xff]
    %v1228 = vld [vmem:[#allocation2 + $0x8] sm:$0xf]
    %v1231 = vcombine.high %v1227, %v1227
    %1232 = vrot.lane.b32.xlu0 %v1227, 91
    %v1233 = vpop.permute.xlu0 %1232
    %1234 = vrot.lane.b32.xlu0 %v1231, 91
    %v1235 = vpop.permute.xlu0 %1234
    %1236 = vrot.lane.b32.xlu0 %v1228, 91
    %v1237 = vpop.permute.xlu0 %1236
    %vm1238 = vcmask 744448
    %v1239 = vsel %vm1238, %v1233, %v1235
    %v1240 = vsel %vm1238, %v1235, %v1237
    %v1243 = vmul.f32 %v1226, %v1239
    %v1244 = vmul.f32 %v1226, %v1240
    %v1245 = vadd.f32 %v1195, %v1243
    %v1246 = vadd.f32 %v1196, %v1244
    %s1247 = sld [smem:[#allocation9 + $0x1a]]
    %s1248 = sld [smem:[#allocation9 + $0x4b]]
    %v1249 = vstv %s1247
    %v1250 = vstv %s1248
    %v1251 = vsel %vm222, %v1249, %v1250
    %v1252 = vld [vmem:[#allocation2] sm:$0xff]
    %v1253 = vld [vmem:[#allocation2 + $0x8] sm:$0xf]
    %v1256 = vcombine.high %v1252, %v1252
    %1257 = vrot.lane.b32.xlu0 %v1252, 75
    %v1258 = vpop.permute.xlu0 %1257
    %1259 = vrot.lane.b32.xlu0 %v1256, 75
    %v1260 = vpop.permute.xlu0 %1259
    %1261 = vrot.lane.b32.xlu0 %v1253, 75
    %v1262 = vpop.permute.xlu0 %1261
    %vm1263 = vcmask 613376
    %v1264 = vsel %vm1263, %v1258, %v1260
    %v1265 = vsel %vm1263, %v1260, %v1262
    %v1268 = vmul.f32 %v1251, %v1264
    %v1269 = vmul.f32 %v1251, %v1265
    %v1270 = vadd.f32 %v1220, %v1268
    %v1271 = vadd.f32 %v1221, %v1269
    %s1272 = sld [smem:[#allocation9 + $0x21]]
    %s1273 = sld [smem:[#allocation9 + $0x52]]
    %v1274 = vstv %s1272
    %v1275 = vstv %s1273
    %v1276 = vsel %vm222, %v1274, %v1275
    %v1277 = vld [vmem:[#allocation2] sm:$0xff]
    %v1278 = vld [vmem:[#allocation2 + $0x8] sm:$0xf]
    %v1281 = vcombine.high %v1277, %v1277
    %1282 = vrot.lane.b32.xlu0 %v1277, 59
    %v1283 = vpop.permute.xlu0 %1282
    %1284 = vrot.lane.b32.xlu0 %v1281, 59
    %v1285 = vpop.permute.xlu0 %1284
    %1286 = vrot.lane.b32.xlu0 %v1278, 59
    %v1287 = vpop.permute.xlu0 %1286
    %vm1288 = vcmask 482304
    %v1289 = vsel %vm1288, %v1283, %v1285
    %v1290 = vsel %vm1288, %v1285, %v1287
    %v1293 = vmul.f32 %v1276, %v1289
    %v1294 = vmul.f32 %v1276, %v1290
    %v1295 = vadd.f32 %v1245, %v1293
    %v1296 = vadd.f32 %v1246, %v1294
    %s1297 = sld [smem:[#allocation9 + $0x28]]
    %s1298 = sld [smem:[#allocation9 + $0x59]]
    %v1299 = vstv %s1297
    %v1300 = vstv %s1298
    %v1301 = vsel %vm222, %v1299, %v1300
    %v1302 = vld [vmem:[#allocation2] sm:$0xff]
    %v1303 = vld [vmem:[#allocation2 + $0x8] sm:$0xf]
    %v1306 = vcombine.high %v1302, %v1302
    %1307 = vrot.lane.b32.xlu0 %v1302, 43
    %v1308 = vpop.permute.xlu0 %1307
    %1309 = vrot.lane.b32.xlu0 %v1306, 43
    %v1310 = vpop.permute.xlu0 %1309
    %1311 = vrot.lane.b32.xlu0 %v1303, 43
    %v1312 = vpop.permute.xlu0 %1311
    %vm1313 = vcmask 351232
    %v1314 = vsel %vm1313, %v1308, %v1310
    %v1315 = vsel %vm1313, %v1310, %v1312
    %v1318 = vmul.f32 %v1301, %v1314
    %v1319 = vmul.f32 %v1301, %v1315
    %v1320 = vadd.f32 %v1270, %v1318
    %v1321 = vadd.f32 %v1271, %v1319
    %s1322 = sld [smem:[#allocation9 + $0x2f]]
    %s1323 = sld [smem:[#allocation9 + $0x60]]
    %v1324 = vstv %s1322
    %v1325 = vstv %s1323
    %v1326 = vsel %vm222, %v1324, %v1325
    %v1327 = vld [vmem:[#allocation2] sm:$0xff]
    %v1328 = vld [vmem:[#allocation2 + $0x8] sm:$0xf]
    %v1331 = vcombine.high %v1327, %v1327
    %1332 = vrot.lane.b32.xlu0 %v1327, 27
    %v1333 = vpop.permute.xlu0 %1332
    %1334 = vrot.lane.b32.xlu0 %v1331, 27
    %v1335 = vpop.permute.xlu0 %1334
    %1336 = vrot.lane.b32.xlu0 %v1328, 27
    %v1337 = vpop.permute.xlu0 %1336
    %vm1338 = vcmask 220160
    %v1339 = vsel %vm1338, %v1333, %v1335
    %v1340 = vsel %vm1338, %v1335, %v1337
    %v1343 = vmul.f32 %v1326, %v1339
    %v1344 = vmul.f32 %v1326, %v1340
    %v1345 = vadd.f32 %v1295, %v1343
    %v1346 = vadd.f32 %v1296, %v1344
    %v1347 = vadd.f32 %v1345, %v1320
    %v1348 = vadd.f32 %v1346, %v1321
    %v1349 = vsel %vm1170, 1, 0
    %v1350 = vsel %vm1171, 1, 0
    %vm1351 = vcmp.eq.s32.totalorder %v1349, 1
    %vm1352 = vcmp.eq.s32.totalorder %v1350, 1
    %v1353 = vsel %vm1351, %v1347, 0.0
    %v1354 = vsel %vm1352, %v1348, 0.0
    %v1355 = vadd.f32 %v973, %v1353
    %v1356 = vadd.f32 %v974, %v1354
    %vm1357 = vcmp.ge.s32.totalorder %v218, 4294967293
    %vm1358 = vcmp.ge.s32.totalorder %v219, 4294967293
    %vm1359 = vcmp.lt.s32.totalorder %v218, 13
    %vm1360 = vcmp.lt.s32.totalorder %v219, 13
    %vm1361 = vmand %vm1357, %vm1359
    %vm1362 = vmand %vm1358, %vm1360
    %s1363 = sld [smem:[#allocation9 + $0x6]]
    %s1364 = sld [smem:[#allocation9 + $0x37]]
    %v1365 = vstv %s1363
    %v1366 = vstv %s1364
    %v1367 = vsel %vm222, %v1365, %v1366
    %v1368 = vld [vmem:[#allocation2] sm:$0xff]
    %v1369 = vld [vmem:[#allocation2 + $0x8] sm:$0xf]
    %v1372 = vcombine.high %v1368, %v1368
    %1373 = vrot.lane.b32.xlu0 %v1368, 122
    %v1374 = vpop.permute.xlu0 %1373
    %1375 = vrot.lane.b32.xlu0 %v1372, 122
    %v1376 = vpop.permute.xlu0 %1375
    %1377 = vrot.lane.b32.xlu0 %v1369, 122
    %v1378 = vpop.permute.xlu0 %1377
    %vm1379 = vcmask 998400
    %v1380 = vsel %vm1379, %v1374, %v1376
    %v1381 = vsel %vm1379, %v1376, %v1378
    %v1384 = vmul.f32 %v1367, %v1380
    %v1385 = vmul.f32 %v1367, %v1381
    %v1386 = vadd.f32 %v1384, 0.0
    %v1387 = vadd.f32 %v1385, 0.0
    %s1388 = sld [smem:[#allocation9 + $0xd]]
    %s1389 = sld [smem:[#allocation9 + $0x3e]]
    %v1390 = vstv %s1388
    %v1391 = vstv %s1389
    %v1392 = vsel %vm222, %v1390, %v1391
    %v1393 = vld [vmem:[#allocation2] sm:$0xff]
    %v1394 = vld [vmem:[#allocation2 + $0x8] sm:$0xf]
    %v1397 = vcombine.high %v1393, %v1393
    %1398 = vrot.lane.b32.xlu0 %v1393, 106
    %v1399 = vpop.permute.xlu0 %1398
    %1400 = vrot.lane.b32.xlu0 %v1397, 106
    %v1401 = vpop.permute.xlu0 %1400
    %1402 = vrot.lane.b32.xlu0 %v1394, 106
    %v1403 = vpop.permute.xlu0 %1402
    %vm1404 = vcmask 867328
    %v1405 = vsel %vm1404, %v1399, %v1401
    %v1406 = vsel %vm1404, %v1401, %v1403
    %v1409 = vmul.f32 %v1392, %v1405
    %v1410 = vmul.f32 %v1392, %v1406
    %v1411 = vadd.f32 %v1409, 0.0
    %v1412 = vadd.f32 %v1410, 0.0
    %s1413 = sld [smem:[#allocation9 + $0x14]]
    %s1414 = sld [smem:[#allocation9 + $0x45]]
    %v1415 = vstv %s1413
    %v1416 = vstv %s1414
    %v1417 = vsel %vm222, %v1415, %v1416
    %v1418 = vld [vmem:[#allocation2] sm:$0xff]
    %v1419 = vld [vmem:[#allocation2 + $0x8] sm:$0xf]
    %v1422 = vcombine.high %v1418, %v1418
    %1423 = vrot.lane.b32.xlu0 %v1418, 90
    %v1424 = vpop.permute.xlu0 %1423
    %1425 = vrot.lane.b32.xlu0 %v1422, 90
    %v1426 = vpop.permute.xlu0 %1425
    %1427 = vrot.lane.b32.xlu0 %v1419, 90
    %v1428 = vpop.permute.xlu0 %1427
    %vm1429 = vcmask 736256
    %v1430 = vsel %vm1429, %v1424, %v1426
    %v1431 = vsel %vm1429, %v1426, %v1428
    %v1434 = vmul.f32 %v1417, %v1430
    %v1435 = vmul.f32 %v1417, %v1431
    %v1436 = vadd.f32 %v1386, %v1434
    %v1437 = vadd.f32 %v1387, %v1435
    %s1438 = sld [smem:[#allocation9 + $0x1b]]
    %s1439 = sld [smem:[#allocation9 + $0x4c]]
    %v1440 = vstv %s1438
    %v1441 = vstv %s1439
    %v1442 = vsel %vm222, %v1440, %v1441
    %v1443 = vld [vmem:[#allocation2] sm:$0xff]
    %v1444 = vld [vmem:[#allocation2 + $0x8] sm:$0xf]
    %v1447 = vcombine.high %v1443, %v1443
    %1448 = vrot.lane.b32.xlu0 %v1443, 74
    %v1449 = vpop.permute.xlu0 %1448
    %1450 = vrot.lane.b32.xlu0 %v1447, 74
    %v1451 = vpop.permute.xlu0 %1450
    %1452 = vrot.lane.b32.xlu0 %v1444, 74
    %v1453 = vpop.permute.xlu0 %1452
    %vm1454 = vcmask 605184
    %v1455 = vsel %vm1454, %v1449, %v1451
    %v1456 = vsel %vm1454, %v1451, %v1453
    %v1459 = vmul.f32 %v1442, %v1455
    %v1460 = vmul.f32 %v1442, %v1456
    %v1461 = vadd.f32 %v1411, %v1459
    %v1462 = vadd.f32 %v1412, %v1460
    %s1463 = sld [smem:[#allocation9 + $0x22]]
    %s1464 = sld [smem:[#allocation9 + $0x53]]
    %v1465 = vstv %s1463
    %v1466 = vstv %s1464
    %v1467 = vsel %vm222, %v1465, %v1466
    %v1468 = vld [vmem:[#allocation2] sm:$0xff]
    %v1469 = vld [vmem:[#allocation2 + $0x8] sm:$0xf]
    %v1472 = vcombine.high %v1468, %v1468
    %1473 = vrot.lane.b32.xlu0 %v1468, 58
    %v1474 = vpop.permute.xlu0 %1473
    %1475 = vrot.lane.b32.xlu0 %v1472, 58
    %v1476 = vpop.permute.xlu0 %1475
    %1477 = vrot.lane.b32.xlu0 %v1469, 58
    %v1478 = vpop.permute.xlu0 %1477
    %vm1479 = vcmask 474112
    %v1480 = vsel %vm1479, %v1474, %v1476
    %v1481 = vsel %vm1479, %v1476, %v1478
    %v1484 = vmul.f32 %v1467, %v1480
    %v1485 = vmul.f32 %v1467, %v1481
    %v1486 = vadd.f32 %v1436, %v1484
    %v1487 = vadd.f32 %v1437, %v1485
    %s1488 = sld [smem:[#allocation9 + $0x29]]
    %s1489 = sld [smem:[#allocation9 + $0x5a]]
    %v1490 = vstv %s1488
    %v1491 = vstv %s1489
    %v1492 = vsel %vm222, %v1490, %v1491
    %v1493 = vld [vmem:[#allocation2] sm:$0xff]
    %v1494 = vld [vmem:[#allocation2 + $0x8] sm:$0xf]
    %v1497 = vcombine.high %v1493, %v1493
    %1498 = vrot.lane.b32.xlu0 %v1493, 42
    %v1499 = vpop.permute.xlu0 %1498
    %1500 = vrot.lane.b32.xlu0 %v1497, 42
    %v1501 = vpop.permute.xlu0 %1500
    %1502 = vrot.lane.b32.xlu0 %v1494, 42
    %v1503 = vpop.permute.xlu0 %1502
    %vm1504 = vcmask 343040
    %v1505 = vsel %vm1504, %v1499, %v1501
    %v1506 = vsel %vm1504, %v1501, %v1503
    %v1509 = vmul.f32 %v1492, %v1505
    %v1510 = vmul.f32 %v1492, %v1506
    %v1511 = vadd.f32 %v1461, %v1509
    %v1512 = vadd.f32 %v1462, %v1510
    %s1513 = sld [smem:[#allocation9 + $0x30]]
    %s1514 = sld [smem:[#allocation9 + $0x61]]
    %v1515 = vstv %s1513
    %v1516 = vstv %s1514
    %v1517 = vsel %vm222, %v1515, %v1516
    %v1518 = vld [vmem:[#allocation2] sm:$0xff]
    %v1519 = vld [vmem:[#allocation2 + $0x8] sm:$0xf]
    %v1522 = vcombine.high %v1518, %v1518
    %1523 = vrot.lane.b32.xlu0 %v1518, 26
    %v1524 = vpop.permute.xlu0 %1523
    %1525 = vrot.lane.b32.xlu0 %v1522, 26
    %v1526 = vpop.permute.xlu0 %1525
    %1527 = vrot.lane.b32.xlu0 %v1519, 26
    %v1528 = vpop.permute.xlu0 %1527
    %vm1529 = vcmask 211968
    %v1530 = vsel %vm1529, %v1524, %v1526
    %v1531 = vsel %vm1529, %v1526, %v1528
    %v1534 = vmul.f32 %v1517, %v1530
    %v1535 = vmul.f32 %v1517, %v1531
    %v1536 = vadd.f32 %v1486, %v1534
    %v1537 = vadd.f32 %v1487, %v1535
    %v1538 = vadd.f32 %v1536, %v1511
    %v1539 = vadd.f32 %v1537, %v1512
    %v1540 = vsel %vm1361, 1, 0
    %v1541 = vsel %vm1362, 1, 0
    %vm1542 = vcmp.eq.s32.totalorder %v1540, 1
    %vm1543 = vcmp.eq.s32.totalorder %v1541, 1
    %v1544 = vsel %vm1542, %v1538, 0.0
    %v1545 = vsel %vm1543, %v1539, 0.0
    %v1546 = vadd.f32 %v1164, %v1544
    %v1547 = vadd.f32 %v1165, %v1545
    %v1548 = vadd.f32 %v1546, %v1355
    %v1549 = vadd.f32 %v1547, %v1356
    %v1552 = vrot.slane %v1548, 2
    %v1553 = vrot.slane %v1549, 2
    %v1556 = vadd.f32 %v1548, %v1552
    %v1557 = vadd.f32 %v1549, %v1553
    %s1558 = sld [smem:[#allocation4]]
    %v1559 = vstv %s1558
    %v1560 = vadd.f32 %v1556, %v1559
    %v1561 = vadd.f32 %v1557, %v1559
    %v1562 = vxor.u32 %v1560, 2147483648
    %v1563 = vxor.u32 %v1561, 2147483648
    %v1564 = vmul.f32 %v1562, 1.442695
    %v1565 = vpow.pop %v1564
    %v1566 = vmul.f32 %v1563, 1.442695
    %v1567 = vpow.pop %v1566
    %v1568 = vadd.f32 %v1565, 1.0
    %v1569 = vadd.f32 %v1567, 1.0
    %v1570 = vrcp.pop %v1568
    %v1571 = vmul.f32 1.0, %v1570
    %v1572 = vrcp.pop %v1569
    %v1573 = vmul.f32 1.0, %v1572
    %v1576 = vcombine.low %v1571, %v1573
    %v1578 = vunpack.c.l.s4 1983009808
    %v1579 = vunpack.c.0.s8 %v1578
    %v1580 = vlaneseq
    %v1581 = vshrl.u32 %v1580, 7
    %v1582 = vsub.s32 %v1579, %v1581
    %v1583 = vrot.slane %v1576, %v1582
    %1585 = vst [vmem:[#allocation3] sm:$0xf] %v1583
    %v1586 = vld [vmem:[#allocation3] ss:$2 sm:$0x3]
    %v1587 = vld [vmem:[#allocation5] sm:$0xff]
    %v1589 = vlaneseq
    %v1590 = vshrl.u32 %v1589, 7
    %v1591 = vsub.s32 0, %v1590
    %v1592 = vrot.slane %v1586, %v1591
    %v1593 = vlaneseq
    %v1594 = vshrl.u32 %v1593, 7
    %v1595 = vsub.s32 1, %v1594
    %v1596 = vrot.slane %v1586, %v1595
    %v1597 = vcombine.low %v1592, %v1596
    %v1599 = vmul.f32 %v1587, %v1597
    %1600 = vst [vmem:[#allocation10] sm:$0xff] %v1599
    %s1601 = scalar_lea.vmem [#allocation3], 1
    %v1602 = vld [vmem:[%s1601] ss:$2 sm:$0x3]
    %v1603 = vld [vmem:[%s132] sm:$0xff]
    %v1605 = vlaneseq
    %v1606 = vshrl.u32 %v1605, 7
    %v1607 = vsub.s32 0, %v1606
    %v1608 = vrot.slane %v1602, %v1607
    %v1609 = vlaneseq
    %v1610 = vshrl.u32 %v1609, 7
    %v1611 = vsub.s32 1, %v1610
    %v1612 = vrot.slane %v1602, %v1611
    %v1613 = vcombine.low %v1608, %v1612
    %v1615 = vmul.f32 %v1603, %v1613
    %s1616 = scalar_lea.vmem [#allocation10], 8
    %1617 = vst [vmem:[%s1616] sm:$0xff] %v1615
    // Predicated region
    $region22: #{tpu_custom_call.1} parent=1 // pred_check
      _
    $region23: #{tpu_custom_call.1} parent=1 // pred_check_branch
      %1619 = sbr.rel (0) target = $region25
    $region24: #{tpu_custom_call.1} parent=1 // pred_region
      %s1621 = ssub.s32 256, 256
      %1622 = vsyncadd [#allocation7], %s1621
      %s1623 = sshll.u32 [#allocation10], 4
      %s1624 = int_to_ptr.vmem [resolvable:$true] %s1623
      %1629 = dma.vmem_to_hbm [thread:$0]  %s1624, 256, %s3, [#allocation7], 128, 128, 8
    $region25: #{tpu_custom_call.1} parent=1 // pred_fallthru
      _
    // Predicated region
    $region26: #{tpu_custom_call.1} parent=1 // pred_check
      _
    $region27: #{tpu_custom_call.1} parent=1 // pred_check_branch
      %1631 = sbr.rel (0) target = $region29
    $region28: #{tpu_custom_call.1} parent=1 // pred_region
      %1632 = dma.done [#allocation7], 256
    $region29: #{tpu_custom_call.1} parent=1 // pred_fallthru
      _
    %1633 = vsyncpa [#allocation6], 1
    %1634 = vsyncpa [#allocation7], 1
    %1635 = vsyncpa [#allocation8], 1

</llo_original>
